<compile_context>
chip_gen: v5e
topology: v5e:2x2
jax: 0.10.0
libtpu: 0.0.40
codegen_flags: <defaults>
</compile_context>

<pallas_src>
import numpy as np
import jax
import jax.numpy as jnp
from jax.experimental import pallas as pl
from jax.experimental.pallas import tpu as pltpu

_SUB = 8      # f32 sublane tile
_LANE = 128   # lane tile


def _rup(n, m):
    return (n + m - 1) // m * m


# ----------------------------------------------------------------------------
# Offline weight packing:
#   * permute gate columns (i, f, g, o) -> (i, f, o, g)
#   * pack EVERY weight/bias into one flat (rows, W) f32 buffer, each segment
#     row-padded to a multiple of 8 and lane-padded with zeros to W lanes.
# Zero runtime cost; collapses the kernel's weight traffic to a single DMA.
# ----------------------------------------------------------------------------
def pack_params(params):
    lstm = params["lstm"]
    H = lstm[0][1].shape[0]
    G = 4 * H
    D = lstm[0][0].shape[0]
    O = params["fc1_w"].shape[1]
    L = len(lstm)
    W = _rup(G, _LANE)                      # packed lane width

    def reorder(w):                          # (..., 4H): (i,f,g,o) -> (i,f,o,g)
        return jnp.concatenate(
            [w[..., :2 * H], w[..., 3 * H:], w[..., 2 * H:3 * H]], axis=-1)

    segs = []
    layout = {"H": H, "G": G, "D": D, "O": O, "L": L, "W": W}
    off = 0

    def add(name, mat):
        nonlocal off
        r, c = mat.shape
        rp = _rup(r, _SUB)
        buf = jnp.zeros((rp, W), jnp.float32).at[:r, :c].set(
            mat.astype(jnp.float32))
        segs.append(buf)
        layout[name] = (off, r, c)
        off += rp

    w_ih0, w_hh0, b0 = lstm[0]
    add("w_ih0", reorder(w_ih0))             # (D, 4H)
    add("w_hh0", reorder(w_hh0))             # (H, 4H)
    add("b0", reorder(b0))                   # (1, 4H)
    for l, (w_ih, w_hh, b) in enumerate(lstm[1:], start=1):
        add(f"w_ih{l}", reorder(w_ih))       # (H, 4H)
        add(f"w_hh{l}", reorder(w_hh))       # (H, 4H)
        add(f"b{l}", reorder(b))             # (1, 4H)
    add("fc1_w", params["fc1_w"])            # (H, O), zero-padded to W lanes
    add("fc1_b", params["fc1_b"])            # (1, O)
    add("fc2_wT", params["fc2_w"].T)         # (1, O)
    add("fc2_b", params["fc2_b"])            # (1, 1)

    packed = jnp.concatenate(segs, axis=0)   # one flat, tile-aligned buffer
    layout["rows"] = packed.shape[0]
    return packed, layout


# ----------------------------------------------------------------------------
# Fused kernel builder. Kernel-side gate layout is (i, f, o, g).
# ----------------------------------------------------------------------------
def _make_kernel(layout, T, Bp):
    H, G, L, W = layout["H"], layout["G"], layout["L"], layout["W"]

    def kernel(x_ref, p_ref, out_ref):
        # Static, (8,128)-tile-aligned slices of the packed weight buffer.
        def seg(name, cols):
            off, r, _ = layout[name]
            return p_ref[off:off + r, 0:cols]

        # ---- hoisted weight loads / bias broadcasts ---------------------------
        w_ih0 = seg("w_ih0", G)                          # (D, G)
        w_hh0 = seg("w_hh0", G)                          # (H, G)
        b0    = seg("b0", G)                             # (1, G)
        deep = []
        for l in range(1, L):
            deep.append((seg(f"w_ih{l}", G),             # (H, G)
                         seg(f"w_hh{l}", G),             # (H, G)
                         jnp.broadcast_to(seg(f"b{l}", G), (Bp, G))))
        fc1_w  = seg("fc1_w", W)                         # (H, W)  zero-padded cols
        fc1_b  = seg("fc1_b", W)                         # (1, W)
        fc2_wT = seg("fc2_wT", W)                        # (1, W)
        fc2_b  = seg("fc2_b", 1)                         # (1, 1)

        # ---- layer-0 input projection (+bias) hoisted out of the recurrence ----
        xp = jnp.dot(x_ref[...], w_ih0,
                     preferred_element_type=jnp.float32) + b0     # (T*Bp, G)

        def cell(gates, c_prev):
            # (i, f, o, g): one sigmoid on contiguous [0:3H], one tanh on [3H:4H].
            sig = jax.nn.sigmoid(gates[:, :3 * H])
            g_g = jnp.tanh(gates[:, 3 * H:])
            i_g = sig[:, 0 * H:1 * H]
            f_g = sig[:, 1 * H:2 * H]
            o_g = sig[:, 2 * H:3 * H]
            c_new = f_g * c_prev + i_g * g_g
            h_new = o_g * jnp.tanh(c_new)
            return h_new, c_new

        zeros = jnp.zeros((Bp, H), jnp.float32)
        hs = [zeros] * L
        cs = [zeros] * L

        # ---- fully unrolled time loop (T small & static) ------------------------
        for t in range(T):
            # layer 0: only the recurrent matmul is on the serial path; the xp
            # slab is one whole aligned (8, 128) tile (Bp == 8).
            gates0 = jnp.dot(hs[0], w_hh0, preferred_element_type=jnp.float32) \
                     + xp[t * Bp:(t + 1) * Bp, :]
            hs[0], cs[0] = cell(gates0, cs[0])
            # layers >= 1: two split dots (no runtime concat on the critical path)
            for l in range(1, L):
                w_ih, w_hh, b_l = deep[l - 1]
                gates = (jnp.dot(hs[l - 1], w_ih, preferred_element_type=jnp.float32)
                         + jnp.dot(hs[l], w_hh, preferred_element_type=jnp.float32)
                         + b_l)
                hs[l], cs[l] = cell(gates, cs[l])

        # ---- head on the last timestep's top-layer hidden state -----------------
        # fc1 weights are zero-padded to W lanes, so padded lanes of z are exactly 0.
        z = jnp.dot(hs[L - 1], fc1_w, preferred_element_type=jnp.float32) + fc1_b
        z = jnp.maximum(z, 0.0)
        out = jnp.sum(z * fc2_wT, axis=-1, keepdims=True) + fc2_b   # (Bp, 1)
        out_ref[...] = out.astype(out_ref.dtype)

    return kernel


# ----------------------------------------------------------------------------
# Full forward pass: one fused Pallas kernel, 2 input DMAs, everything in VMEM.
# ----------------------------------------------------------------------------
def make_net_forward(layout, T, B, D):
    Bp = _rup(max(B, 1), _SUB)               # pad batch to the f32 sublane tile
    kernel = _make_kernel(layout, T, Bp)

    @jax.jit
    def fwd(x_btd, packed):
        # batch-first -> time-major, pad batch rows with zeros (discarded later)
        x = jnp.transpose(x_btd.astype(jnp.float32), (1, 0, 2))       # (T, B, D)
        x = jnp.pad(x, ((0, 0), (0, Bp - B), (0, 0)))                 # (T, Bp, D)
        x2d = x.reshape(T * Bp, D)

        out = pl.pallas_call(
            kernel,
            out_shape=jax.ShapeDtypeStruct((Bp, 1), jnp.float32),
            in_specs=[
                pl.BlockSpec(memory_space=pltpu.MemorySpace.VMEM),    # x
                pl.BlockSpec(memory_space=pltpu.MemorySpace.VMEM),    # packed weights
            ],
            out_specs=pl.BlockSpec(memory_space=pltpu.MemorySpace.VMEM),
        )(x2d, packed)
        return out[:B, :]

    return fwd


# ----------------------------------------------------------------------------
# Pure-JAX reference (PyTorch gate order i,f,g,o) for correctness checking.
# ----------------------------------------------------------------------------
def net_forward_ref(x_btd, params):
    x = jnp.transpose(x_btd, (1, 0, 2)).astype(jnp.float32)
    for (w_ih, w_hh, b) in params["lstm"]:
        B = x.shape[1]
        H = w_hh.shape[0]

        def step(carry, x_t):
            h, c = carry
            gates = x_t @ w_ih + h @ w_hh + b[0]
            i_g = jax.nn.sigmoid(gates[:, 0 * H:1 * H])
            f_g = jax.nn.sigmoid(gates[:, 1 * H:2 * H])
            g_g = jnp.tanh(gates[:, 2 * H:3 * H])
            o_g = jax.nn.sigmoid(gates[:, 3 * H:4 * H])
            c = f_g * c + i_g * g_g
            h = o_g * jnp.tanh(c)
            return (h, c), h

        init = (jnp.zeros((B, H), jnp.float32), jnp.zeros((B, H), jnp.float32))
        _, x = jax.lax.scan(step, init, x)
    h_last = x[-1]
    z = jnp.maximum(h_last @ params["fc1_w"] + params["fc1_b"][0], 0.0)
    return z @ params["fc2_w"] + params["fc2_b"][0]


# ----------------------------------------------------------------------------
# Deterministic parameter init (PyTorch-style uniform(-1/sqrt(H), 1/sqrt(H))),
# stored in PyTorch gate order (i, f, g, o), already transposed for x @ W use.
# ----------------------------------------------------------------------------
def init_params(key, input_dim, hidden_dim, output_dim, num_layers):
    params = {"lstm": []}
    bound = 1.0 / np.sqrt(hidden_dim)
    for layer in range(num_layers):
        d_in = input_dim if layer == 0 else hidden_dim
        key, k1, k2, k3, k4 = jax.random.split(key, 5)
        w_ih = jax.random.uniform(k1, (d_in, 4 * hidden_dim), jnp.float32, -bound, bound)
        w_hh = jax.random.uniform(k2, (hidden_dim, 4 * hidden_dim), jnp.float32, -bound, bound)
        b_ih = jax.random.uniform(k3, (4 * hidden_dim,), jnp.float32, -bound, bound)
        b_hh = jax.random.uniform(k4, (4 * hidden_dim,), jnp.float32, -bound, bound)
        params["lstm"].append((w_ih, w_hh, (b_ih + b_hh)[None, :]))

    key, k1, k2, k3, k4 = jax.random.split(key, 5)
    b1 = 1.0 / np.sqrt(hidden_dim)
    params["fc1_w"] = jax.random.uniform(k1, (hidden_dim, output_dim), jnp.float32, -b1, b1)
    params["fc1_b"] = jax.random.uniform(k2, (1, output_dim), jnp.float32, -b1, b1)
    b2 = 1.0 / np.sqrt(output_dim)
    params["fc2_w"] = jax.random.uniform(k3, (output_dim, 1), jnp.float32, -b2, b2)
    params["fc2_b"] = jax.random.uniform(k4, (1, 1), jnp.float32, -b2, b2)
    return params


if __name__ == "__main__":
    # Small shapes consistent with the module's forward:
    batch, seq, input_dim = 2, 8, 16
    hidden_dim, output_dim, num_layers = 32, 8, 2

    key = jax.random.PRNGKey(0)
    key, kx = jax.random.split(key)
    x = jax.random.normal(kx, (batch, seq, input_dim), jnp.float32)

    params = init_params(key, input_dim, hidden_dim, output_dim, num_layers)
    packed, layout = pack_params(params)          # offline gate permute + flat packing

    fwd = make_net_forward(layout, T=seq, B=batch, D=input_dim)
    out = jax.block_until_ready(fwd(x, packed))
    ref = jax.block_until_ready(net_forward_ref(x, params))

    assert out.shape == (batch, 1), out.shape
    np.testing.assert_allclose(np.asarray(out), np.asarray(ref), rtol=1e-4, atol=1e-4)

    print("KERNEL_OK")
</pallas_src>

<mosaic_0001>
module attributes {stable_mosaic.version = 11 : i64} {
  func.func @kernel(%arg0: memref<64x16xf32, #tpu.memory_space<vmem>>, %arg1: memref<184x128xf32, #tpu.memory_space<vmem>>, %arg2: memref<8x1xf32, #tpu.memory_space<vmem>>) attributes {dimension_semantics = [], scalar_prefetch = 0 : i64, scratch_operands = 0 : i64, tpu.core_type = #tpu.core_type<tc>} {
    %c0 = arith.constant 0 : index
    %c0_0 = arith.constant 0 : index
    %0 = vector.load %arg1[%c0, %c0_0] : memref<184x128xf32, #tpu.memory_space<vmem>>, vector<16x128xf32>
    %c16 = arith.constant 16 : index
    %c0_1 = arith.constant 0 : index
    %1 = vector.load %arg1[%c16, %c0_1] : memref<184x128xf32, #tpu.memory_space<vmem>>, vector<32x128xf32>
    %c48 = arith.constant 48 : index
    %c0_2 = arith.constant 0 : index
    %2 = vector.load %arg1[%c48, %c0_2] : memref<184x128xf32, #tpu.memory_space<vmem>>, vector<1x128xf32>
    %c56 = arith.constant 56 : index
    %c0_3 = arith.constant 0 : index
    %3 = vector.load %arg1[%c56, %c0_3] : memref<184x128xf32, #tpu.memory_space<vmem>>, vector<32x128xf32>
    %c88 = arith.constant 88 : index
    %c0_4 = arith.constant 0 : index
    %4 = vector.load %arg1[%c88, %c0_4] : memref<184x128xf32, #tpu.memory_space<vmem>>, vector<32x128xf32>
    %c120 = arith.constant 120 : index
    %c0_5 = arith.constant 0 : index
    %5 = vector.load %arg1[%c120, %c0_5] : memref<184x128xf32, #tpu.memory_space<vmem>>, vector<1x128xf32>
    %6 = vector.shape_cast %5 : vector<1x128xf32> to vector<1x128xf32>
    %7 = vector.broadcast %6 : vector<1x128xf32> to vector<8x128xf32>
    %c128 = arith.constant 128 : index
    %c0_6 = arith.constant 0 : index
    %8 = vector.load %arg1[%c128, %c0_6] : memref<184x128xf32, #tpu.memory_space<vmem>>, vector<32x128xf32>
    %c160 = arith.constant 160 : index
    %c0_7 = arith.constant 0 : index
    %9 = vector.load %arg1[%c160, %c0_7] : memref<184x128xf32, #tpu.memory_space<vmem>>, vector<1x128xf32>
    %c168 = arith.constant 168 : index
    %c0_8 = arith.constant 0 : index
    %10 = vector.load %arg1[%c168, %c0_8] : memref<184x128xf32, #tpu.memory_space<vmem>>, vector<1x128xf32>
    %c176 = arith.constant 176 : index
    %c0_9 = arith.constant 0 : index
    %11 = vector.load %arg1[%c176, %c0_9] : memref<184x128xf32, #tpu.memory_space<vmem>>, vector<1x1xf32>
    %c0_10 = arith.constant 0 : index
    %c0_11 = arith.constant 0 : index
    %12 = vector.load %arg0[%c0_10, %c0_11] : memref<64x16xf32, #tpu.memory_space<vmem>>, vector<64x16xf32>
    %cst = arith.constant dense<0.000000e+00> : vector<64x128xf32>
    %13 = tpu.matmul %12, %0, %cst {dimension_numbers = #tpu.dot_dimension_numbers<[1], [0], [0], [1], [0, 0, 1, 1], [], []>} : vector<64x16xf32>, vector<16x128xf32>, vector<64x128xf32> -> vector<64x128xf32>
    %14 = vector.broadcast %2 : vector<1x128xf32> to vector<64x128xf32>
    %15 = arith.addf %13, %14 : vector<64x128xf32>
    %cst_12 = arith.constant 0.000000e+00 : f32
    %16 = vector.broadcast %cst_12 : f32 to vector<8x32xf32>
    %cst_13 = arith.constant dense<0.000000e+00> : vector<8x128xf32>
    %17 = tpu.matmul %16, %1, %cst_13 {dimension_numbers = #tpu.dot_dimension_numbers<[1], [0], [0], [1], [0, 0, 1, 1], [], []>} : vector<8x32xf32>, vector<32x128xf32>, vector<8x128xf32> -> vector<8x128xf32>
    %18 = vector.extract_strided_slice %15 {offsets = [0, 0], sizes = [8, 128], strides = [1, 1]} : vector<64x128xf32> to vector<8x128xf32>
    %19 = arith.addf %17, %18 : vector<8x128xf32>
    %20 = vector.extract_strided_slice %19 {offsets = [0, 0], sizes = [8, 96], strides = [1, 1]} : vector<8x128xf32> to vector<8x96xf32>
    %21 = arith.negf %20 : vector<8x96xf32>
    %22 = math.exp %21 : vector<8x96xf32>
    %cst_14 = arith.constant 1.000000e+00 : f32
    %23 = vector.broadcast %cst_14 : f32 to vector<8x96xf32>
    %24 = arith.addf %23, %22 : vector<8x96xf32>
    %25 = arith.divf %23, %24 : vector<8x96xf32>
    %26 = vector.extract_strided_slice %19 {offsets = [0, 96], sizes = [8, 32], strides = [1, 1]} : vector<8x128xf32> to vector<8x32xf32>
    %27 = math.tanh %26 : vector<8x32xf32>
    %28 = vector.extract_strided_slice %25 {offsets = [0, 0], sizes = [8, 32], strides = [1, 1]} : vector<8x96xf32> to vector<8x32xf32>
    %29 = vector.extract_strided_slice %25 {offsets = [0, 32], sizes = [8, 32], strides = [1, 1]} : vector<8x96xf32> to vector<8x32xf32>
    %30 = vector.extract_strided_slice %25 {offsets = [0, 64], sizes = [8, 32], strides = [1, 1]} : vector<8x96xf32> to vector<8x32xf32>
    %31 = arith.mulf %29, %16 : vector<8x32xf32>
    %32 = arith.mulf %28, %27 : vector<8x32xf32>
    %33 = arith.addf %31, %32 : vector<8x32xf32>
    %34 = math.tanh %33 : vector<8x32xf32>
    %35 = arith.mulf %30, %34 : vector<8x32xf32>
    %cst_15 = arith.constant dense<0.000000e+00> : vector<8x128xf32>
    %36 = tpu.matmul %35, %3, %cst_15 {dimension_numbers = #tpu.dot_dimension_numbers<[1], [0], [0], [1], [0, 0, 1, 1], [], []>} : vector<8x32xf32>, vector<32x128xf32>, vector<8x128xf32> -> vector<8x128xf32>
    %cst_16 = arith.constant dense<0.000000e+00> : vector<8x128xf32>
    %37 = tpu.matmul %16, %4, %cst_16 {dimension_numbers = #tpu.dot_dimension_numbers<[1], [0], [0], [1], [0, 0, 1, 1], [], []>} : vector<8x32xf32>, vector<32x128xf32>, vector<8x128xf32> -> vector<8x128xf32>
    %38 = arith.addf %36, %37 : vector<8x128xf32>
    %39 = arith.addf %38, %7 : vector<8x128xf32>
    %40 = vector.extract_strided_slice %39 {offsets = [0, 0], sizes = [8, 96], strides = [1, 1]} : vector<8x128xf32> to vector<8x96xf32>
    %41 = arith.negf %40 : vector<8x96xf32>
    %42 = math.exp %41 : vector<8x96xf32>
    %cst_17 = arith.constant 1.000000e+00 : f32
    %43 = vector.broadcast %cst_17 : f32 to vector<8x96xf32>
    %44 = arith.addf %43, %42 : vector<8x96xf32>
    %45 = arith.divf %43, %44 : vector<8x96xf32>
    %46 = vector.extract_strided_slice %39 {offsets = [0, 96], sizes = [8, 32], strides = [1, 1]} : vector<8x128xf32> to vector<8x32xf32>
    %47 = math.tanh %46 : vector<8x32xf32>
    %48 = vector.extract_strided_slice %45 {offsets = [0, 0], sizes = [8, 32], strides = [1, 1]} : vector<8x96xf32> to vector<8x32xf32>
    %49 = vector.extract_strided_slice %45 {offsets = [0, 32], sizes = [8, 32], strides = [1, 1]} : vector<8x96xf32> to vector<8x32xf32>
    %50 = vector.extract_strided_slice %45 {offsets = [0, 64], sizes = [8, 32], strides = [1, 1]} : vector<8x96xf32> to vector<8x32xf32>
    %51 = arith.mulf %49, %16 : vector<8x32xf32>
    %52 = arith.mulf %48, %47 : vector<8x32xf32>
    %53 = arith.addf %51, %52 : vector<8x32xf32>
    %54 = math.tanh %53 : vector<8x32xf32>
    %55 = arith.mulf %50, %54 : vector<8x32xf32>
    %cst_18 = arith.constant dense<0.000000e+00> : vector<8x128xf32>
    %56 = tpu.matmul %35, %1, %cst_18 {dimension_numbers = #tpu.dot_dimension_numbers<[1], [0], [0], [1], [0, 0, 1, 1], [], []>} : vector<8x32xf32>, vector<32x128xf32>, vector<8x128xf32> -> vector<8x128xf32>
    %57 = vector.extract_strided_slice %15 {offsets = [8, 0], sizes = [8, 128], strides = [1, 1]} : vector<64x128xf32> to vector<8x128xf32>
    %58 = arith.addf %56, %57 : vector<8x128xf32>
    %59 = vector.extract_strided_slice %58 {offsets = [0, 0], sizes = [8, 96], strides = [1, 1]} : vector<8x128xf32> to vector<8x96xf32>
    %60 = arith.negf %59 : vector<8x96xf32>
    %61 = math.exp %60 : vector<8x96xf32>
    %cst_19 = arith.constant 1.000000e+00 : f32
    %62 = vector.broadcast %cst_19 : f32 to vector<8x96xf32>
    %63 = arith.addf %62, %61 : vector<8x96xf32>
    %64 = arith.divf %62, %63 : vector<8x96xf32>
    %65 = vector.extract_strided_slice %58 {offsets = [0, 96], sizes = [8, 32], strides = [1, 1]} : vector<8x128xf32> to vector<8x32xf32>
    %66 = math.tanh %65 : vector<8x32xf32>
    %67 = vector.extract_strided_slice %64 {offsets = [0, 0], sizes = [8, 32], strides = [1, 1]} : vector<8x96xf32> to vector<8x32xf32>
    %68 = vector.extract_strided_slice %64 {offsets = [0, 32], sizes = [8, 32], strides = [1, 1]} : vector<8x96xf32> to vector<8x32xf32>
    %69 = vector.extract_strided_slice %64 {offsets = [0, 64], sizes = [8, 32], strides = [1, 1]} : vector<8x96xf32> to vector<8x32xf32>
    %70 = arith.mulf %68, %33 : vector<8x32xf32>
    %71 = arith.mulf %67, %66 : vector<8x32xf32>
    %72 = arith.addf %70, %71 : vector<8x32xf32>
    %73 = math.tanh %72 : vector<8x32xf32>
    %74 = arith.mulf %69, %73 : vector<8x32xf32>
    %cst_20 = arith.constant dense<0.000000e+00> : vector<8x128xf32>
    %75 = tpu.matmul %74, %3, %cst_20 {dimension_numbers = #tpu.dot_dimension_numbers<[1], [0], [0], [1], [0, 0, 1, 1], [], []>} : vector<8x32xf32>, vector<32x128xf32>, vector<8x128xf32> -> vector<8x128xf32>
    %cst_21 = arith.constant dense<0.000000e+00> : vector<8x128xf32>
    %76 = tpu.matmul %55, %4, %cst_21 {dimension_numbers = #tpu.dot_dimension_numbers<[1], [0], [0], [1], [0, 0, 1, 1], [], []>} : vector<8x32xf32>, vector<32x128xf32>, vector<8x128xf32> -> vector<8x128xf32>
    %77 = arith.addf %75, %76 : vector<8x128xf32>
    %78 = arith.addf %77, %7 : vector<8x128xf32>
    %79 = vector.extract_strided_slice %78 {offsets = [0, 0], sizes = [8, 96], strides = [1, 1]} : vector<8x128xf32> to vector<8x96xf32>
    %80 = arith.negf %79 : vector<8x96xf32>
    %81 = math.exp %80 : vector<8x96xf32>
    %cst_22 = arith.constant 1.000000e+00 : f32
    %82 = vector.broadcast %cst_22 : f32 to vector<8x96xf32>
    %83 = arith.addf %82, %81 : vector<8x96xf32>
    %84 = arith.divf %82, %83 : vector<8x96xf32>
    %85 = vector.extract_strided_slice %78 {offsets = [0, 96], sizes = [8, 32], strides = [1, 1]} : vector<8x128xf32> to vector<8x32xf32>
    %86 = math.tanh %85 : vector<8x32xf32>
    %87 = vector.extract_strided_slice %84 {offsets = [0, 0], sizes = [8, 32], strides = [1, 1]} : vector<8x96xf32> to vector<8x32xf32>
    %88 = vector.extract_strided_slice %84 {offsets = [0, 32], sizes = [8, 32], strides = [1, 1]} : vector<8x96xf32> to vector<8x32xf32>
    %89 = vector.extract_strided_slice %84 {offsets = [0, 64], sizes = [8, 32], strides = [1, 1]} : vector<8x96xf32> to vector<8x32xf32>
    %90 = arith.mulf %88, %53 : vector<8x32xf32>
    %91 = arith.mulf %87, %86 : vector<8x32xf32>
    %92 = arith.addf %90, %91 : vector<8x32xf32>
    %93 = math.tanh %92 : vector<8x32xf32>
    %94 = arith.mulf %89, %93 : vector<8x32xf32>
    %cst_23 = arith.constant dense<0.000000e+00> : vector<8x128xf32>
    %95 = tpu.matmul %74, %1, %cst_23 {dimension_numbers = #tpu.dot_dimension_numbers<[1], [0], [0], [1], [0, 0, 1, 1], [], []>} : vector<8x32xf32>, vector<32x128xf32>, vector<8x128xf32> -> vector<8x128xf32>
    %96 = vector.extract_strided_slice %15 {offsets = [16, 0], sizes = [8, 128], strides = [1, 1]} : vector<64x128xf32> to vector<8x128xf32>
    %97 = arith.addf %95, %96 : vector<8x128xf32>
    %98 = vector.extract_strided_slice %97 {offsets = [0, 0], sizes = [8, 96], strides = [1, 1]} : vector<8x128xf32> to vector<8x96xf32>
    %99 = arith.negf %98 : vector<8x96xf32>
    %100 = math.exp %99 : vector<8x96xf32>
    %cst_24 = arith.constant 1.000000e+00 : f32
    %101 = vector.broadcast %cst_24 : f32 to vector<8x96xf32>
    %102 = arith.addf %101, %100 : vector<8x96xf32>
    %103 = arith.divf %101, %102 : vector<8x96xf32>
    %104 = vector.extract_strided_slice %97 {offsets = [0, 96], sizes = [8, 32], strides = [1, 1]} : vector<8x128xf32> to vector<8x32xf32>
    %105 = math.tanh %104 : vector<8x32xf32>
    %106 = vector.extract_strided_slice %103 {offsets = [0, 0], sizes = [8, 32], strides = [1, 1]} : vector<8x96xf32> to vector<8x32xf32>
    %107 = vector.extract_strided_slice %103 {offsets = [0, 32], sizes = [8, 32], strides = [1, 1]} : vector<8x96xf32> to vector<8x32xf32>
    %108 = vector.extract_strided_slice %103 {offsets = [0, 64], sizes = [8, 32], strides = [1, 1]} : vector<8x96xf32> to vector<8x32xf32>
    %109 = arith.mulf %107, %72 : vector<8x32xf32>
    %110 = arith.mulf %106, %105 : vector<8x32xf32>
    %111 = arith.addf %109, %110 : vector<8x32xf32>
    %112 = math.tanh %111 : vector<8x32xf32>
    %113 = arith.mulf %108, %112 : vector<8x32xf32>
    %cst_25 = arith.constant dense<0.000000e+00> : vector<8x128xf32>
    %114 = tpu.matmul %113, %3, %cst_25 {dimension_numbers = #tpu.dot_dimension_numbers<[1], [0], [0], [1], [0, 0, 1, 1], [], []>} : vector<8x32xf32>, vector<32x128xf32>, vector<8x128xf32> -> vector<8x128xf32>
    %cst_26 = arith.constant dense<0.000000e+00> : vector<8x128xf32>
    %115 = tpu.matmul %94, %4, %cst_26 {dimension_numbers = #tpu.dot_dimension_numbers<[1], [0], [0], [1], [0, 0, 1, 1], [], []>} : vector<8x32xf32>, vector<32x128xf32>, vector<8x128xf32> -> vector<8x128xf32>
    %116 = arith.addf %114, %115 : vector<8x128xf32>
    %117 = arith.addf %116, %7 : vector<8x128xf32>
    %118 = vector.extract_strided_slice %117 {offsets = [0, 0], sizes = [8, 96], strides = [1, 1]} : vector<8x128xf32> to vector<8x96xf32>
    %119 = arith.negf %118 : vector<8x96xf32>
    %120 = math.exp %119 : vector<8x96xf32>
    %cst_27 = arith.constant 1.000000e+00 : f32
    %121 = vector.broadcast %cst_27 : f32 to vector<8x96xf32>
    %122 = arith.addf %121, %120 : vector<8x96xf32>
    %123 = arith.divf %121, %122 : vector<8x96xf32>
    %124 = vector.extract_strided_slice %117 {offsets = [0, 96], sizes = [8, 32], strides = [1, 1]} : vector<8x128xf32> to vector<8x32xf32>
    %125 = math.tanh %124 : vector<8x32xf32>
    %126 = vector.extract_strided_slice %123 {offsets = [0, 0], sizes = [8, 32], strides = [1, 1]} : vector<8x96xf32> to vector<8x32xf32>
    %127 = vector.extract_strided_slice %123 {offsets = [0, 32], sizes = [8, 32], strides = [1, 1]} : vector<8x96xf32> to vector<8x32xf32>
    %128 = vector.extract_strided_slice %123 {offsets = [0, 64], sizes = [8, 32], strides = [1, 1]} : vector<8x96xf32> to vector<8x32xf32>
    %129 = arith.mulf %127, %92 : vector<8x32xf32>
    %130 = arith.mulf %126, %125 : vector<8x32xf32>
    %131 = arith.addf %129, %130 : vector<8x32xf32>
    %132 = math.tanh %131 : vector<8x32xf32>
    %133 = arith.mulf %128, %132 : vector<8x32xf32>
    %cst_28 = arith.constant dense<0.000000e+00> : vector<8x128xf32>
    %134 = tpu.matmul %113, %1, %cst_28 {dimension_numbers = #tpu.dot_dimension_numbers<[1], [0], [0], [1], [0, 0, 1, 1], [], []>} : vector<8x32xf32>, vector<32x128xf32>, vector<8x128xf32> -> vector<8x128xf32>
    %135 = vector.extract_strided_slice %15 {offsets = [24, 0], sizes = [8, 128], strides = [1, 1]} : vector<64x128xf32> to vector<8x128xf32>
    %136 = arith.addf %134, %135 : vector<8x128xf32>
    %137 = vector.extract_strided_slice %136 {offsets = [0, 0], sizes = [8, 96], strides = [1, 1]} : vector<8x128xf32> to vector<8x96xf32>
    %138 = arith.negf %137 : vector<8x96xf32>
    %139 = math.exp %138 : vector<8x96xf32>
    %cst_29 = arith.constant 1.000000e+00 : f32
    %140 = vector.broadcast %cst_29 : f32 to vector<8x96xf32>
    %141 = arith.addf %140, %139 : vector<8x96xf32>
    %142 = arith.divf %140, %141 : vector<8x96xf32>
    %143 = vector.extract_strided_slice %136 {offsets = [0, 96], sizes = [8, 32], strides = [1, 1]} : vector<8x128xf32> to vector<8x32xf32>
    %144 = math.tanh %143 : vector<8x32xf32>
    %145 = vector.extract_strided_slice %142 {offsets = [0, 0], sizes = [8, 32], strides = [1, 1]} : vector<8x96xf32> to vector<8x32xf32>
    %146 = vector.extract_strided_slice %142 {offsets = [0, 32], sizes = [8, 32], strides = [1, 1]} : vector<8x96xf32> to vector<8x32xf32>
    %147 = vector.extract_strided_slice %142 {offsets = [0, 64], sizes = [8, 32], strides = [1, 1]} : vector<8x96xf32> to vector<8x32xf32>
    %148 = arith.mulf %146, %111 : vector<8x32xf32>
    %149 = arith.mulf %145, %144 : vector<8x32xf32>
    %150 = arith.addf %148, %149 : vector<8x32xf32>
    %151 = math.tanh %150 : vector<8x32xf32>
    %152 = arith.mulf %147, %151 : vector<8x32xf32>
    %cst_30 = arith.constant dense<0.000000e+00> : vector<8x128xf32>
    %153 = tpu.matmul %152, %3, %cst_30 {dimension_numbers = #tpu.dot_dimension_numbers<[1], [0], [0], [1], [0, 0, 1, 1], [], []>} : vector<8x32xf32>, vector<32x128xf32>, vector<8x128xf32> -> vector<8x128xf32>
    %cst_31 = arith.constant dense<0.000000e+00> : vector<8x128xf32>
    %154 = tpu.matmul %133, %4, %cst_31 {dimension_numbers = #tpu.dot_dimension_numbers<[1], [0], [0], [1], [0, 0, 1, 1], [], []>} : vector<8x32xf32>, vector<32x128xf32>, vector<8x128xf32> -> vector<8x128xf32>
    %155 = arith.addf %153, %154 : vector<8x128xf32>
    %156 = arith.addf %155, %7 : vector<8x128xf32>
    %157 = vector.extract_strided_slice %156 {offsets = [0, 0], sizes = [8, 96], strides = [1, 1]} : vector<8x128xf32> to vector<8x96xf32>
    %158 = arith.negf %157 : vector<8x96xf32>
    %159 = math.exp %158 : vector<8x96xf32>
    %cst_32 = arith.constant 1.000000e+00 : f32
    %160 = vector.broadcast %cst_32 : f32 to vector<8x96xf32>
    %161 = arith.addf %160, %159 : vector<8x96xf32>
    %162 = arith.divf %160, %161 : vector<8x96xf32>
    %163 = vector.extract_strided_slice %156 {offsets = [0, 96], sizes = [8, 32], strides = [1, 1]} : vector<8x128xf32> to vector<8x32xf32>
    %164 = math.tanh %163 : vector<8x32xf32>
    %165 = vector.extract_strided_slice %162 {offsets = [0, 0], sizes = [8, 32], strides = [1, 1]} : vector<8x96xf32> to vector<8x32xf32>
    %166 = vector.extract_strided_slice %162 {offsets = [0, 32], sizes = [8, 32], strides = [1, 1]} : vector<8x96xf32> to vector<8x32xf32>
    %167 = vector.extract_strided_slice %162 {offsets = [0, 64], sizes = [8, 32], strides = [1, 1]} : vector<8x96xf32> to vector<8x32xf32>
    %168 = arith.mulf %166, %131 : vector<8x32xf32>
    %169 = arith.mulf %165, %164 : vector<8x32xf32>
    %170 = arith.addf %168, %169 : vector<8x32xf32>
    %171 = math.tanh %170 : vector<8x32xf32>
    %172 = arith.mulf %167, %171 : vector<8x32xf32>
    %cst_33 = arith.constant dense<0.000000e+00> : vector<8x128xf32>
    %173 = tpu.matmul %152, %1, %cst_33 {dimension_numbers = #tpu.dot_dimension_numbers<[1], [0], [0], [1], [0, 0, 1, 1], [], []>} : vector<8x32xf32>, vector<32x128xf32>, vector<8x128xf32> -> vector<8x128xf32>
    %174 = vector.extract_strided_slice %15 {offsets = [32, 0], sizes = [8, 128], strides = [1, 1]} : vector<64x128xf32> to vector<8x128xf32>
    %175 = arith.addf %173, %174 : vector<8x128xf32>
    %176 = vector.extract_strided_slice %175 {offsets = [0, 0], sizes = [8, 96], strides = [1, 1]} : vector<8x128xf32> to vector<8x96xf32>
    %177 = arith.negf %176 : vector<8x96xf32>
    %178 = math.exp %177 : vector<8x96xf32>
    %cst_34 = arith.constant 1.000000e+00 : f32
    %179 = vector.broadcast %cst_34 : f32 to vector<8x96xf32>
    %180 = arith.addf %179, %178 : vector<8x96xf32>
    %181 = arith.divf %179, %180 : vector<8x96xf32>
    %182 = vector.extract_strided_slice %175 {offsets = [0, 96], sizes = [8, 32], strides = [1, 1]} : vector<8x128xf32> to vector<8x32xf32>
    %183 = math.tanh %182 : vector<8x32xf32>
    %184 = vector.extract_strided_slice %181 {offsets = [0, 0], sizes = [8, 32], strides = [1, 1]} : vector<8x96xf32> to vector<8x32xf32>
    %185 = vector.extract_strided_slice %181 {offsets = [0, 32], sizes = [8, 32], strides = [1, 1]} : vector<8x96xf32> to vector<8x32xf32>
    %186 = vector.extract_strided_slice %181 {offsets = [0, 64], sizes = [8, 32], strides = [1, 1]} : vector<8x96xf32> to vector<8x32xf32>
    %187 = arith.mulf %185, %150 : vector<8x32xf32>
    %188 = arith.mulf %184, %183 : vector<8x32xf32>
    %189 = arith.addf %187, %188 : vector<8x32xf32>
    %190 = math.tanh %189 : vector<8x32xf32>
    %191 = arith.mulf %186, %190 : vector<8x32xf32>
    %cst_35 = arith.constant dense<0.000000e+00> : vector<8x128xf32>
    %192 = tpu.matmul %191, %3, %cst_35 {dimension_numbers = #tpu.dot_dimension_numbers<[1], [0], [0], [1], [0, 0, 1, 1], [], []>} : vector<8x32xf32>, vector<32x128xf32>, vector<8x128xf32> -> vector<8x128xf32>
    %cst_36 = arith.constant dense<0.000000e+00> : vector<8x128xf32>
    %193 = tpu.matmul %172, %4, %cst_36 {dimension_numbers = #tpu.dot_dimension_numbers<[1], [0], [0], [1], [0, 0, 1, 1], [], []>} : vector<8x32xf32>, vector<32x128xf32>, vector<8x128xf32> -> vector<8x128xf32>
    %194 = arith.addf %192, %193 : vector<8x128xf32>
    %195 = arith.addf %194, %7 : vector<8x128xf32>
    %196 = vector.extract_strided_slice %195 {offsets = [0, 0], sizes = [8, 96], strides = [1, 1]} : vector<8x128xf32> to vector<8x96xf32>
    %197 = arith.negf %196 : vector<8x96xf32>
    %198 = math.exp %197 : vector<8x96xf32>
    %cst_37 = arith.constant 1.000000e+00 : f32
    %199 = vector.broadcast %cst_37 : f32 to vector<8x96xf32>
    %200 = arith.addf %199, %198 : vector<8x96xf32>
    %201 = arith.divf %199, %200 : vector<8x96xf32>
    %202 = vector.extract_strided_slice %195 {offsets = [0, 96], sizes = [8, 32], strides = [1, 1]} : vector<8x128xf32> to vector<8x32xf32>
    %203 = math.tanh %202 : vector<8x32xf32>
    %204 = vector.extract_strided_slice %201 {offsets = [0, 0], sizes = [8, 32], strides = [1, 1]} : vector<8x96xf32> to vector<8x32xf32>
    %205 = vector.extract_strided_slice %201 {offsets = [0, 32], sizes = [8, 32], strides = [1, 1]} : vector<8x96xf32> to vector<8x32xf32>
    %206 = vector.extract_strided_slice %201 {offsets = [0, 64], sizes = [8, 32], strides = [1, 1]} : vector<8x96xf32> to vector<8x32xf32>
    %207 = arith.mulf %205, %170 : vector<8x32xf32>
    %208 = arith.mulf %204, %203 : vector<8x32xf32>
    %209 = arith.addf %207, %208 : vector<8x32xf32>
    %210 = math.tanh %209 : vector<8x32xf32>
    %211 = arith.mulf %206, %210 : vector<8x32xf32>
    %cst_38 = arith.constant dense<0.000000e+00> : vector<8x128xf32>
    %212 = tpu.matmul %191, %1, %cst_38 {dimension_numbers = #tpu.dot_dimension_numbers<[1], [0], [0], [1], [0, 0, 1, 1], [], []>} : vector<8x32xf32>, vector<32x128xf32>, vector<8x128xf32> -> vector<8x128xf32>
    %213 = vector.extract_strided_slice %15 {offsets = [40, 0], sizes = [8, 128], strides = [1, 1]} : vector<64x128xf32> to vector<8x128xf32>
    %214 = arith.addf %212, %213 : vector<8x128xf32>
    %215 = vector.extract_strided_slice %214 {offsets = [0, 0], sizes = [8, 96], strides = [1, 1]} : vector<8x128xf32> to vector<8x96xf32>
    %216 = arith.negf %215 : vector<8x96xf32>
    %217 = math.exp %216 : vector<8x96xf32>
    %cst_39 = arith.constant 1.000000e+00 : f32
    %218 = vector.broadcast %cst_39 : f32 to vector<8x96xf32>
    %219 = arith.addf %218, %217 : vector<8x96xf32>
    %220 = arith.divf %218, %219 : vector<8x96xf32>
    %221 = vector.extract_strided_slice %214 {offsets = [0, 96], sizes = [8, 32], strides = [1, 1]} : vector<8x128xf32> to vector<8x32xf32>
    %222 = math.tanh %221 : vector<8x32xf32>
    %223 = vector.extract_strided_slice %220 {offsets = [0, 0], sizes = [8, 32], strides = [1, 1]} : vector<8x96xf32> to vector<8x32xf32>
    %224 = vector.extract_strided_slice %220 {offsets = [0, 32], sizes = [8, 32], strides = [1, 1]} : vector<8x96xf32> to vector<8x32xf32>
    %225 = vector.extract_strided_slice %220 {offsets = [0, 64], sizes = [8, 32], strides = [1, 1]} : vector<8x96xf32> to vector<8x32xf32>
    %226 = arith.mulf %224, %189 : vector<8x32xf32>
    %227 = arith.mulf %223, %222 : vector<8x32xf32>
    %228 = arith.addf %226, %227 : vector<8x32xf32>
    %229 = math.tanh %228 : vector<8x32xf32>
    %230 = arith.mulf %225, %229 : vector<8x32xf32>
    %cst_40 = arith.constant dense<0.000000e+00> : vector<8x128xf32>
    %231 = tpu.matmul %230, %3, %cst_40 {dimension_numbers = #tpu.dot_dimension_numbers<[1], [0], [0], [1], [0, 0, 1, 1], [], []>} : vector<8x32xf32>, vector<32x128xf32>, vector<8x128xf32> -> vector<8x128xf32>
    %cst_41 = arith.constant dense<0.000000e+00> : vector<8x128xf32>
    %232 = tpu.matmul %211, %4, %cst_41 {dimension_numbers = #tpu.dot_dimension_numbers<[1], [0], [0], [1], [0, 0, 1, 1], [], []>} : vector<8x32xf32>, vector<32x128xf32>, vector<8x128xf32> -> vector<8x128xf32>
    %233 = arith.addf %231, %232 : vector<8x128xf32>
    %234 = arith.addf %233, %7 : vector<8x128xf32>
    %235 = vector.extract_strided_slice %234 {offsets = [0, 0], sizes = [8, 96], strides = [1, 1]} : vector<8x128xf32> to vector<8x96xf32>
    %236 = arith.negf %235 : vector<8x96xf32>
    %237 = math.exp %236 : vector<8x96xf32>
    %cst_42 = arith.constant 1.000000e+00 : f32
    %238 = vector.broadcast %cst_42 : f32 to vector<8x96xf32>
    %239 = arith.addf %238, %237 : vector<8x96xf32>
    %240 = arith.divf %238, %239 : vector<8x96xf32>
    %241 = vector.extract_strided_slice %234 {offsets = [0, 96], sizes = [8, 32], strides = [1, 1]} : vector<8x128xf32> to vector<8x32xf32>
    %242 = math.tanh %241 : vector<8x32xf32>
    %243 = vector.extract_strided_slice %240 {offsets = [0, 0], sizes = [8, 32], strides = [1, 1]} : vector<8x96xf32> to vector<8x32xf32>
    %244 = vector.extract_strided_slice %240 {offsets = [0, 32], sizes = [8, 32], strides = [1, 1]} : vector<8x96xf32> to vector<8x32xf32>
    %245 = vector.extract_strided_slice %240 {offsets = [0, 64], sizes = [8, 32], strides = [1, 1]} : vector<8x96xf32> to vector<8x32xf32>
    %246 = arith.mulf %244, %209 : vector<8x32xf32>
    %247 = arith.mulf %243, %242 : vector<8x32xf32>
    %248 = arith.addf %246, %247 : vector<8x32xf32>
    %249 = math.tanh %248 : vector<8x32xf32>
    %250 = arith.mulf %245, %249 : vector<8x32xf32>
    %cst_43 = arith.constant dense<0.000000e+00> : vector<8x128xf32>
    %251 = tpu.matmul %230, %1, %cst_43 {dimension_numbers = #tpu.dot_dimension_numbers<[1], [0], [0], [1], [0, 0, 1, 1], [], []>} : vector<8x32xf32>, vector<32x128xf32>, vector<8x128xf32> -> vector<8x128xf32>
    %252 = vector.extract_strided_slice %15 {offsets = [48, 0], sizes = [8, 128], strides = [1, 1]} : vector<64x128xf32> to vector<8x128xf32>
    %253 = arith.addf %251, %252 : vector<8x128xf32>
    %254 = vector.extract_strided_slice %253 {offsets = [0, 0], sizes = [8, 96], strides = [1, 1]} : vector<8x128xf32> to vector<8x96xf32>
    %255 = arith.negf %254 : vector<8x96xf32>
    %256 = math.exp %255 : vector<8x96xf32>
    %cst_44 = arith.constant 1.000000e+00 : f32
    %257 = vector.broadcast %cst_44 : f32 to vector<8x96xf32>
    %258 = arith.addf %257, %256 : vector<8x96xf32>
    %259 = arith.divf %257, %258 : vector<8x96xf32>
    %260 = vector.extract_strided_slice %253 {offsets = [0, 96], sizes = [8, 32], strides = [1, 1]} : vector<8x128xf32> to vector<8x32xf32>
    %261 = math.tanh %260 : vector<8x32xf32>
    %262 = vector.extract_strided_slice %259 {offsets = [0, 0], sizes = [8, 32], strides = [1, 1]} : vector<8x96xf32> to vector<8x32xf32>
    %263 = vector.extract_strided_slice %259 {offsets = [0, 32], sizes = [8, 32], strides = [1, 1]} : vector<8x96xf32> to vector<8x32xf32>
    %264 = vector.extract_strided_slice %259 {offsets = [0, 64], sizes = [8, 32], strides = [1, 1]} : vector<8x96xf32> to vector<8x32xf32>
    %265 = arith.mulf %263, %228 : vector<8x32xf32>
    %266 = arith.mulf %262, %261 : vector<8x32xf32>
    %267 = arith.addf %265, %266 : vector<8x32xf32>
    %268 = math.tanh %267 : vector<8x32xf32>
    %269 = arith.mulf %264, %268 : vector<8x32xf32>
    %cst_45 = arith.constant dense<0.000000e+00> : vector<8x128xf32>
    %270 = tpu.matmul %269, %3, %cst_45 {dimension_numbers = #tpu.dot_dimension_numbers<[1], [0], [0], [1], [0, 0, 1, 1], [], []>} : vector<8x32xf32>, vector<32x128xf32>, vector<8x128xf32> -> vector<8x128xf32>
    %cst_46 = arith.constant dense<0.000000e+00> : vector<8x128xf32>
    %271 = tpu.matmul %250, %4, %cst_46 {dimension_numbers = #tpu.dot_dimension_numbers<[1], [0], [0], [1], [0, 0, 1, 1], [], []>} : vector<8x32xf32>, vector<32x128xf32>, vector<8x128xf32> -> vector<8x128xf32>
    %272 = arith.addf %270, %271 : vector<8x128xf32>
    %273 = arith.addf %272, %7 : vector<8x128xf32>
    %274 = vector.extract_strided_slice %273 {offsets = [0, 0], sizes = [8, 96], strides = [1, 1]} : vector<8x128xf32> to vector<8x96xf32>
    %275 = arith.negf %274 : vector<8x96xf32>
    %276 = math.exp %275 : vector<8x96xf32>
    %cst_47 = arith.constant 1.000000e+00 : f32
    %277 = vector.broadcast %cst_47 : f32 to vector<8x96xf32>
    %278 = arith.addf %277, %276 : vector<8x96xf32>
    %279 = arith.divf %277, %278 : vector<8x96xf32>
    %280 = vector.extract_strided_slice %273 {offsets = [0, 96], sizes = [8, 32], strides = [1, 1]} : vector<8x128xf32> to vector<8x32xf32>
    %281 = math.tanh %280 : vector<8x32xf32>
    %282 = vector.extract_strided_slice %279 {offsets = [0, 0], sizes = [8, 32], strides = [1, 1]} : vector<8x96xf32> to vector<8x32xf32>
    %283 = vector.extract_strided_slice %279 {offsets = [0, 32], sizes = [8, 32], strides = [1, 1]} : vector<8x96xf32> to vector<8x32xf32>
    %284 = vector.extract_strided_slice %279 {offsets = [0, 64], sizes = [8, 32], strides = [1, 1]} : vector<8x96xf32> to vector<8x32xf32>
    %285 = arith.mulf %283, %248 : vector<8x32xf32>
    %286 = arith.mulf %282, %281 : vector<8x32xf32>
    %287 = arith.addf %285, %286 : vector<8x32xf32>
    %288 = math.tanh %287 : vector<8x32xf32>
    %289 = arith.mulf %284, %288 : vector<8x32xf32>
    %cst_48 = arith.constant dense<0.000000e+00> : vector<8x128xf32>
    %290 = tpu.matmul %269, %1, %cst_48 {dimension_numbers = #tpu.dot_dimension_numbers<[1], [0], [0], [1], [0, 0, 1, 1], [], []>} : vector<8x32xf32>, vector<32x128xf32>, vector<8x128xf32> -> vector<8x128xf32>
    %291 = vector.extract_strided_slice %15 {offsets = [56, 0], sizes = [8, 128], strides = [1, 1]} : vector<64x128xf32> to vector<8x128xf32>
    %292 = arith.addf %290, %291 : vector<8x128xf32>
    %293 = vector.extract_strided_slice %292 {offsets = [0, 0], sizes = [8, 96], strides = [1, 1]} : vector<8x128xf32> to vector<8x96xf32>
    %294 = arith.negf %293 : vector<8x96xf32>
    %295 = math.exp %294 : vector<8x96xf32>
    %cst_49 = arith.constant 1.000000e+00 : f32
    %296 = vector.broadcast %cst_49 : f32 to vector<8x96xf32>
    %297 = arith.addf %296, %295 : vector<8x96xf32>
    %298 = arith.divf %296, %297 : vector<8x96xf32>
    %299 = vector.extract_strided_slice %292 {offsets = [0, 96], sizes = [8, 32], strides = [1, 1]} : vector<8x128xf32> to vector<8x32xf32>
    %300 = math.tanh %299 : vector<8x32xf32>
    %301 = vector.extract_strided_slice %298 {offsets = [0, 0], sizes = [8, 32], strides = [1, 1]} : vector<8x96xf32> to vector<8x32xf32>
    %302 = vector.extract_strided_slice %298 {offsets = [0, 32], sizes = [8, 32], strides = [1, 1]} : vector<8x96xf32> to vector<8x32xf32>
    %303 = vector.extract_strided_slice %298 {offsets = [0, 64], sizes = [8, 32], strides = [1, 1]} : vector<8x96xf32> to vector<8x32xf32>
    %304 = arith.mulf %302, %267 : vector<8x32xf32>
    %305 = arith.mulf %301, %300 : vector<8x32xf32>
    %306 = arith.addf %304, %305 : vector<8x32xf32>
    %307 = math.tanh %306 : vector<8x32xf32>
    %308 = arith.mulf %303, %307 : vector<8x32xf32>
    %cst_50 = arith.constant dense<0.000000e+00> : vector<8x128xf32>
    %309 = tpu.matmul %308, %3, %cst_50 {dimension_numbers = #tpu.dot_dimension_numbers<[1], [0], [0], [1], [0, 0, 1, 1], [], []>} : vector<8x32xf32>, vector<32x128xf32>, vector<8x128xf32> -> vector<8x128xf32>
    %cst_51 = arith.constant dense<0.000000e+00> : vector<8x128xf32>
    %310 = tpu.matmul %289, %4, %cst_51 {dimension_numbers = #tpu.dot_dimension_numbers<[1], [0], [0], [1], [0, 0, 1, 1], [], []>} : vector<8x32xf32>, vector<32x128xf32>, vector<8x128xf32> -> vector<8x128xf32>
    %311 = arith.addf %309, %310 : vector<8x128xf32>
    %312 = arith.addf %311, %7 : vector<8x128xf32>
    %313 = vector.extract_strided_slice %312 {offsets = [0, 0], sizes = [8, 96], strides = [1, 1]} : vector<8x128xf32> to vector<8x96xf32>
    %314 = arith.negf %313 : vector<8x96xf32>
    %315 = math.exp %314 : vector<8x96xf32>
    %cst_52 = arith.constant 1.000000e+00 : f32
    %316 = vector.broadcast %cst_52 : f32 to vector<8x96xf32>
    %317 = arith.addf %316, %315 : vector<8x96xf32>
    %318 = arith.divf %316, %317 : vector<8x96xf32>
    %319 = vector.extract_strided_slice %312 {offsets = [0, 96], sizes = [8, 32], strides = [1, 1]} : vector<8x128xf32> to vector<8x32xf32>
    %320 = math.tanh %319 : vector<8x32xf32>
    %321 = vector.extract_strided_slice %318 {offsets = [0, 0], sizes = [8, 32], strides = [1, 1]} : vector<8x96xf32> to vector<8x32xf32>
    %322 = vector.extract_strided_slice %318 {offsets = [0, 32], sizes = [8, 32], strides = [1, 1]} : vector<8x96xf32> to vector<8x32xf32>
    %323 = vector.extract_strided_slice %318 {offsets = [0, 64], sizes = [8, 32], strides = [1, 1]} : vector<8x96xf32> to vector<8x32xf32>
    %324 = arith.mulf %322, %287 : vector<8x32xf32>
    %325 = arith.mulf %321, %320 : vector<8x32xf32>
    %326 = arith.addf %324, %325 : vector<8x32xf32>
    %327 = math.tanh %326 : vector<8x32xf32>
    %328 = arith.mulf %323, %327 : vector<8x32xf32>
    %cst_53 = arith.constant dense<0.000000e+00> : vector<8x128xf32>
    %329 = tpu.matmul %328, %8, %cst_53 {dimension_numbers = #tpu.dot_dimension_numbers<[1], [0], [0], [1], [0, 0, 1, 1], [], []>} : vector<8x32xf32>, vector<32x128xf32>, vector<8x128xf32> -> vector<8x128xf32>
    %330 = vector.broadcast %9 : vector<1x128xf32> to vector<8x128xf32>
    %331 = arith.addf %329, %330 : vector<8x128xf32>
    %cst_54 = arith.constant 0.000000e+00 : f32
    %332 = vector.broadcast %cst_54 : f32 to vector<8x128xf32>
    %333 = arith.maximumf %331, %332 : vector<8x128xf32>
    %334 = vector.broadcast %10 : vector<1x128xf32> to vector<8x128xf32>
    %335 = arith.mulf %333, %334 : vector<8x128xf32>
    %cst_55 = arith.constant dense<0.000000e+00> : vector<8xf32>
    %336 = vector.multi_reduction <add>, %335, %cst_55 [1] : vector<8x128xf32> to vector<8xf32>
    %337 = vector.shape_cast %336 : vector<8xf32> to vector<8x1xf32>
    %338 = vector.broadcast %11 : vector<1x1xf32> to vector<8x1xf32>
    %339 = arith.addf %337, %338 : vector<8x1xf32>
    %c0_56 = arith.constant 0 : index
    %c0_57 = arith.constant 0 : index
    %340 = vector.load %arg2[%c0_56, %c0_57] : memref<8x1xf32, #tpu.memory_space<vmem>>, vector<8x1xf32>
    tpu.vector_store %arg2[%c0_56, %c0_57], %339 {strides = array<i32>} : memref<8x1xf32, #tpu.memory_space<vmem>>, vector<8x1xf32>,
    return
  }
}

</mosaic_0001>

<llo_original>
// kernel: fwd.1
$region0: #{fwd.1}
  #allocation0 [shape = 'u32[]', space=smem, size = 0x4, offset = 0x4, fixed_abs, tag = 'smem constant byte address 0x4 - core index']
  #allocation1 [shape = 'u32[72,128]{1,0:T(1,128)}', space=vmem, size = 0x9000, scoped, tag = 'internal scratch']
  %s0 = inlined_call_operand.vmem [shape: f32[64,16], index: 0, kind: input, shape index: {}]
  %s1 = inlined_call_operand.hbm [shape: f32[184,128], index: 1, kind: input, shape index: {}]
  %s2 = inlined_call_operand.vmem [shape: f32[8,1], index: 2, kind: output, shape index: {}]
  %s3 = sld [smem:[#allocation0]]
  $region22: #{fwd.1} parent=0
    _
  %s5 = ssub.s32 1, %s3
  %s6 = scalar_select 0, %s5, %s3
  $region1: #{fwd.1} parent=0
    #allocation2 [shape = 'u8[94208]{0}', space=vmem, size = 0x17000, scoped, tag = 'input window, operand 1, single buffered']
    #allocation3 [shape = 's32[1]{0}', space=sflag, size = 0x4, scoped, tag = 'scoped memory for fwd.1']
    %7 = vsyncpa [#allocation3], 0
    // Predicated region
    $region2: #{fwd.1} parent=1 // pred_check
      _
    $region3: #{fwd.1} parent=1 // pred_check_branch
      %9 = sbr.rel (0) target = $region5
    $region4: #{fwd.1} parent=1 // pred_region
      _
    $region5: #{fwd.1} parent=1 // pred_fallthru
      _
    // Predicated region
    $region6: #{fwd.1} parent=1 // pred_check
      _
    $region7: #{fwd.1} parent=1 // pred_check_branch
      %11 = sbr.rel (0) target = $region9
    $region8: #{fwd.1} parent=1 // pred_region
      %13 = vsyncadd [#allocation3], 0
      %s14 = sshll.u32 %s1, 4
      %s15 = int_to_ptr.hbm [resolvable:$true] %s14
      %s16 = sshll.u32 [#allocation2], 4
      %s17 = int_to_ptr.vmem [resolvable:$true] %s16
      %22 = dma.hbm_to_vmem [thread:$0]  %s15, 2944, %s17, [#allocation3], 128, 128, 8
    $region9: #{fwd.1} parent=1 // pred_fallthru
      _
    // Predicated region
    $region10: #{fwd.1} parent=1 // pred_check
      _
    $region11: #{fwd.1} parent=1 // pred_check_branch
      %24 = sbr.rel (0) target = $region13
    $region12: #{fwd.1} parent=1 // pred_region
      %26 = dma.done [#allocation3], 2944
    $region13: #{fwd.1} parent=1 // pred_fallthru
      _
    %v27 = vld [vmem:[#allocation2] sm:$0xff]
    %v28 = vld [vmem:[#allocation2 + $0x8] sm:$0xff]
    %v29 = vld [vmem:[#allocation2 + $0x10] sm:$0xff]
    %v30 = vld [vmem:[#allocation2 + $0x18] sm:$0xff]
    %v31 = vld [vmem:[#allocation2 + $0x20] sm:$0xff]
    %v32 = vld [vmem:[#allocation2 + $0x28] sm:$0xff]
    %v33 = vld [vmem:[#allocation2 + $0x30] sm:$0x1]
    %v34 = vld [vmem:[#allocation2 + $0x38] sm:$0xff]
    %v35 = vld [vmem:[#allocation2 + $0x40] sm:$0xff]
    %v36 = vld [vmem:[#allocation2 + $0x48] sm:$0xff]
    %v37 = vld [vmem:[#allocation2 + $0x50] sm:$0xff]
    %v38 = vld [vmem:[#allocation2 + $0x58] sm:$0xff]
    %v39 = vld [vmem:[#allocation2 + $0x60] sm:$0xff]
    %v40 = vld [vmem:[#allocation2 + $0x68] sm:$0xff]
    %v41 = vld [vmem:[#allocation2 + $0x70] sm:$0xff]
    %v42 = vld [vmem:[#allocation2 + $0x78] sm:$0x1]
    %v43 = vperm.slane %v42, 0
    %v44 = vld [vmem:[#allocation2 + $0x80] sm:$0xff]
    %v45 = vld [vmem:[#allocation2 + $0x88] sm:$0xff]
    %v46 = vld [vmem:[#allocation2 + $0x90] sm:$0xff]
    %v47 = vld [vmem:[#allocation2 + $0x98] sm:$0xff]
    %v48 = vld [vmem:[#allocation2 + $0xa0] sm:$0x1]
    %v49 = vld [vmem:[#allocation2 + $0xa8] sm:$0x1]
    %v50 = vld [vmem:[#allocation2 + $0xb0] sm:$0x1]
    %v51 = vld [vmem:[%s0] sm:$0xff]
    %v52 = vld [vmem:[%s0 + $0x8] sm:$0xff]
    %v53 = vld [vmem:[%s0 + $0x10] sm:$0xff]
    %v54 = vld [vmem:[%s0 + $0x18] sm:$0xff]
    %v55 = vld [vmem:[%s0 + $0x20] sm:$0xff]
    %v56 = vld [vmem:[%s0 + $0x28] sm:$0xff]
    %v57 = vld [vmem:[%s0 + $0x30] sm:$0xff]
    %v58 = vld [vmem:[%s0 + $0x38] sm:$0xff]
    %v59 = vperm.slane %v33, 0
    %vm60 = vcmask 130048
    %v62 = vsel %vm60, %v51, 0
    %v65 = vsel %vm60, %v52, 0
    %v68 = vsel %vm60, %v53, 0
    %v71 = vsel %vm60, %v54, 0
    %v74 = vsel %vm60, %v55, 0
    %v77 = vsel %vm60, %v56, 0
    %v80 = vsel %vm60, %v57, 0
    %v83 = vsel %vm60, %v58, 0
    %85 = vmatpush.msra.mxu0 0.0
    %86 = vmatpush.msra.mxu0 0.0
    %87 = vmatpush.msra.mxu0 0.0
    %88 = vmatpush.msra.mxu0 0.0
    %89 = vmatpush.msra.mxu0 0.0
    %90 = vmatpush.msra.mxu0 0.0
    %91 = vmatpush.msra.mxu0 0.0
    %92 = vmatpush.msra.mxu0 0.0
    %93 = vmatpush.msra.mxu0 0.0
    %94 = vmatpush.msra.mxu0 0.0
    %95 = vmatpush.msra.mxu0 0.0
    %96 = vmatpush.msra.mxu0 0.0
    %97 = vmatpush.msra.mxu0 0.0
    %98 = vmatpush.msra.mxu0 0.0
    %99 = vmatpush.msra.mxu0 %v28
    %100 = vmatpush.msra.mxu0 %v27
    %101 = vmatmul.f32.gmra.mxu0 %v62
    %v102 = vpop.f32.mrf.mxu0
    %v103 = vadd.f32 %v59, %v102
    %104 = vmatmul.f32.gmra.mxu0 %v65
    %v105 = vpop.f32.mrf.mxu0
    %v106 = vadd.f32 %v59, %v105
    %107 = vmatmul.f32.gmra.mxu0 %v68
    %v108 = vpop.f32.mrf.mxu0
    %v109 = vadd.f32 %v59, %v108
    %110 = vmatmul.f32.gmra.mxu0 %v71
    %v111 = vpop.f32.mrf.mxu0
    %v112 = vadd.f32 %v59, %v111
    %113 = vmatmul.f32.gmra.mxu0 %v74
    %v114 = vpop.f32.mrf.mxu0
    %v115 = vadd.f32 %v59, %v114
    %116 = vmatmul.f32.gmra.mxu0 %v77
    %v117 = vpop.f32.mrf.mxu0
    %v118 = vadd.f32 %v59, %v117
    %119 = vmatmul.f32.gmra.mxu0 %v80
    %v120 = vpop.f32.mrf.mxu0
    %v121 = vadd.f32 %v59, %v120
    %122 = vmatmul.f32.gmra.mxu0 %v83
    %v123 = vpop.f32.mrf.mxu0
    %v124 = vadd.f32 %v59, %v123
    %125 = vdwg.mxu0
    %vm126 = vcmask 261120
    %v128 = vsel %vm126, 0.0, 0
    %130 = vmatpush.msra.mxu0 0.0
    %131 = vmatpush.msra.mxu0 0.0
    %132 = vmatpush.msra.mxu0 0.0
    %133 = vmatpush.msra.mxu0 0.0
    %134 = vmatpush.msra.mxu0 0.0
    %135 = vmatpush.msra.mxu0 0.0
    %136 = vmatpush.msra.mxu0 0.0
    %137 = vmatpush.msra.mxu0 0.0
    %138 = vmatpush.msra.mxu0 0.0
    %139 = vmatpush.msra.mxu0 0.0
    %140 = vmatpush.msra.mxu0 0.0
    %141 = vmatpush.msra.mxu0 0.0
    %142 = vmatpush.msra.mxu0 %v32
    %143 = vmatpush.msra.mxu0 %v31
    %144 = vmatpush.msra.mxu0 %v30
    %145 = vmatpush.msra.mxu0 %v29
    %146 = vmatmul.f32.gmra.mxu0 %v128
    %v147 = vpop.f32.mrf.mxu0
    %v148 = vadd.f32 %v103, %v147
    %149 = vdwg.mxu0
    %v150 = vxor.u32 %v148, 2147483648
    %v151 = vmul.f32 %v150, 1.442695
    %v152 = vpow.pop %v151
    %v153 = vadd.f32 %v152, 1.0
    %v154 = vrcp.pop %v153
    %v155 = vmul.f32 %v153, %v154
    %v156 = vsub.f32 1.0, %v155
    %v157 = vmul.f32 %v154, %v156
    %v158 = vadd.f32 %v154, %v157
    %vm159 = vweird.f32 %v153
    %vm160 = vweird.f32 %v154
    %vm161 = vmor %vm159, %vm160
    %v162 = vsel %vm161, %v154, %v158
    %v163 = vand.u32 2147483647, %v153
    %vm164 = vcmp.eq.f32.partialorder %v163, 8.507059e+37
    %v165 = vand.u32 %v153, 2147483648
    %v166 = vor.u32 1.1754944e-38, %v165
    %v167 = vsel %vm164, %v166, %v162
    %v168 = vmul.f32 1.0, %v167
    %v169 = vtanh.pop %v148
    %v170 = vmul.f32 %v168, 0.0
    %172 = vrot.lane.b32.xlu0 %v169, 32
    %v173 = vpop.permute.xlu0 %172
    %v175 = vmul.f32 %v168, %v173
    %177 = vrot.lane.b32.xlu0 %v175, 32
    %v178 = vpop.permute.xlu0 %177
    %v180 = vadd.f32 %v170, %v178
    %v181 = vtanh.pop %v180
    %183 = vrot.lane.b32.xlu0 %v181, 32
    %v184 = vpop.permute.xlu0 %183
    %v186 = vmul.f32 %v168, %v184
    %187 = vmatpush.msra.mxu0 0.0
    %188 = vmatpush.msra.mxu0 0.0
    %189 = vmatpush.msra.mxu0 0.0
    %190 = vmatpush.msra.mxu0 0.0
    %191 = vmatpush.msra.mxu0 0.0
    %192 = vmatpush.msra.mxu0 0.0
    %193 = vmatpush.msra.mxu0 0.0
    %194 = vmatpush.msra.mxu0 0.0
    %195 = vmatpush.msra.mxu0 0.0
    %196 = vmatpush.msra.mxu0 0.0
    %197 = vmatpush.msra.mxu0 0.0
    %198 = vmatpush.msra.mxu0 0.0
    %199 = vmatpush.msra.mxu0 %v41
    %200 = vmatpush.msra.mxu0 %v40
    %201 = vmatpush.msra.mxu0 %v39
    %202 = vmatpush.msra.mxu0 %v38
    %203 = vmatmul.f32.gmra.mxu0 %v128
    %v204 = vpop.f32.mrf.mxu0
    %v205 = vadd.f32 0.0, %v204
    %206 = vdwg.mxu0
    %208 = vrot.lane.b32.xlu0 %v186, 64
    %v209 = vpop.permute.xlu0 %208
    %v210 = vsel %vm126, %v209, 0
    %212 = vmatpush.msra.mxu0 0.0
    %213 = vmatpush.msra.mxu0 0.0
    %214 = vmatpush.msra.mxu0 0.0
    %215 = vmatpush.msra.mxu0 0.0
    %216 = vmatpush.msra.mxu0 0.0
    %217 = vmatpush.msra.mxu0 0.0
    %218 = vmatpush.msra.mxu0 0.0
    %219 = vmatpush.msra.mxu0 0.0
    %220 = vmatpush.msra.mxu0 0.0
    %221 = vmatpush.msra.mxu0 0.0
    %222 = vmatpush.msra.mxu0 0.0
    %223 = vmatpush.msra.mxu0 0.0
    %224 = vmatpush.msra.mxu0 %v37
    %225 = vmatpush.msra.mxu0 %v36
    %226 = vmatpush.msra.mxu0 %v35
    %227 = vmatpush.msra.mxu0 %v34
    %228 = vmatmul.f32.gmra.mxu0 %v210
    %v229 = vpop.f32.mrf.mxu0
    %v230 = vadd.f32 %v205, %v229
    %231 = vdwg.mxu0
    %v232 = vadd.f32 %v230, %v43
    %v233 = vxor.u32 %v232, 2147483648
    %v234 = vmul.f32 %v233, 1.442695
    %v235 = vpow.pop %v234
    %v236 = vadd.f32 %v235, 1.0
    %v237 = vrcp.pop %v236
    %v238 = vmul.f32 %v236, %v237
    %v239 = vsub.f32 1.0, %v238
    %v240 = vmul.f32 %v237, %v239
    %v241 = vadd.f32 %v237, %v240
    %vm242 = vweird.f32 %v236
    %vm243 = vweird.f32 %v237
    %vm244 = vmor %vm242, %vm243
    %v245 = vsel %vm244, %v237, %v241
    %v246 = vand.u32 2147483647, %v236
    %vm247 = vcmp.eq.f32.partialorder %v246, 8.507059e+37
    %v248 = vand.u32 %v236, 2147483648
    %v249 = vor.u32 1.1754944e-38, %v248
    %v250 = vsel %vm247, %v249, %v245
    %v251 = vmul.f32 1.0, %v250
    %v252 = vtanh.pop %v232
    %v253 = vmul.f32 %v251, 0.0
    %255 = vrot.lane.b32.xlu0 %v252, 32
    %v256 = vpop.permute.xlu0 %255
    %v258 = vmul.f32 %v251, %v256
    %260 = vrot.lane.b32.xlu0 %v258, 32
    %v261 = vpop.permute.xlu0 %260
    %v263 = vadd.f32 %v253, %v261
    %v264 = vtanh.pop %v263
    %266 = vrot.lane.b32.xlu0 %v264, 32
    %v267 = vpop.permute.xlu0 %266
    %v269 = vmul.f32 %v251, %v267
    %270 = vmatpush.msra.mxu0 0.0
    %271 = vmatpush.msra.mxu0 0.0
    %272 = vmatpush.msra.mxu0 0.0
    %273 = vmatpush.msra.mxu0 0.0
    %274 = vmatpush.msra.mxu0 0.0
    %275 = vmatpush.msra.mxu0 0.0
    %276 = vmatpush.msra.mxu0 0.0
    %277 = vmatpush.msra.mxu0 0.0
    %278 = vmatpush.msra.mxu0 0.0
    %279 = vmatpush.msra.mxu0 0.0
    %280 = vmatpush.msra.mxu0 0.0
    %281 = vmatpush.msra.mxu0 0.0
    %282 = vmatpush.msra.mxu0 %v32
    %283 = vmatpush.msra.mxu0 %v31
    %284 = vmatpush.msra.mxu0 %v30
    %285 = vmatpush.msra.mxu0 %v29
    %286 = vmatmul.f32.gmra.mxu0 %v210
    %v287 = vpop.f32.mrf.mxu0
    %v288 = vadd.f32 %v106, %v287
    %289 = vdwg.mxu0
    %v290 = vxor.u32 %v288, 2147483648
    %v291 = vmul.f32 %v290, 1.442695
    %v292 = vpow.pop %v291
    %v293 = vadd.f32 %v292, 1.0
    %v294 = vrcp.pop %v293
    %v295 = vmul.f32 %v293, %v294
    %v296 = vsub.f32 1.0, %v295
    %v297 = vmul.f32 %v294, %v296
    %v298 = vadd.f32 %v294, %v297
    %vm299 = vweird.f32 %v293
    %vm300 = vweird.f32 %v294
    %vm301 = vmor %vm299, %vm300
    %v302 = vsel %vm301, %v294, %v298
    %v303 = vand.u32 2147483647, %v293
    %vm304 = vcmp.eq.f32.partialorder %v303, 8.507059e+37
    %v305 = vand.u32 %v293, 2147483648
    %v306 = vor.u32 1.1754944e-38, %v305
    %v307 = vsel %vm304, %v306, %v302
    %v308 = vmul.f32 1.0, %v307
    %v309 = vtanh.pop %v288
    %v310 = vmul.f32 %v308, %v180
    %312 = vrot.lane.b32.xlu0 %v309, 32
    %v313 = vpop.permute.xlu0 %312
    %v315 = vmul.f32 %v308, %v313
    %317 = vrot.lane.b32.xlu0 %v315, 32
    %v318 = vpop.permute.xlu0 %317
    %v320 = vadd.f32 %v310, %v318
    %v321 = vtanh.pop %v320
    %323 = vrot.lane.b32.xlu0 %v321, 32
    %v324 = vpop.permute.xlu0 %323
    %v326 = vmul.f32 %v308, %v324
    %328 = vrot.lane.b32.xlu0 %v269, 64
    %v329 = vpop.permute.xlu0 %328
    %v330 = vsel %vm126, %v329, 0
    %332 = vmatpush.msra.mxu0 0.0
    %333 = vmatpush.msra.mxu0 0.0
    %334 = vmatpush.msra.mxu0 0.0
    %335 = vmatpush.msra.mxu0 0.0
    %336 = vmatpush.msra.mxu0 0.0
    %337 = vmatpush.msra.mxu0 0.0
    %338 = vmatpush.msra.mxu0 0.0
    %339 = vmatpush.msra.mxu0 0.0
    %340 = vmatpush.msra.mxu0 0.0
    %341 = vmatpush.msra.mxu0 0.0
    %342 = vmatpush.msra.mxu0 0.0
    %343 = vmatpush.msra.mxu0 0.0
    %344 = vmatpush.msra.mxu0 %v41
    %345 = vmatpush.msra.mxu0 %v40
    %346 = vmatpush.msra.mxu0 %v39
    %347 = vmatpush.msra.mxu0 %v38
    %348 = vmatmul.f32.gmra.mxu0 %v330
    %v349 = vpop.f32.mrf.mxu0
    %v350 = vadd.f32 0.0, %v349
    %351 = vdwg.mxu0
    %353 = vrot.lane.b32.xlu0 %v326, 64
    %v354 = vpop.permute.xlu0 %353
    %v355 = vsel %vm126, %v354, 0
    %357 = vmatpush.msra.mxu0 0.0
    %358 = vmatpush.msra.mxu0 0.0
    %359 = vmatpush.msra.mxu0 0.0
    %360 = vmatpush.msra.mxu0 0.0
    %361 = vmatpush.msra.mxu0 0.0
    %362 = vmatpush.msra.mxu0 0.0
    %363 = vmatpush.msra.mxu0 0.0
    %364 = vmatpush.msra.mxu0 0.0
    %365 = vmatpush.msra.mxu0 0.0
    %366 = vmatpush.msra.mxu0 0.0
    %367 = vmatpush.msra.mxu0 0.0
    %368 = vmatpush.msra.mxu0 0.0
    %369 = vmatpush.msra.mxu0 %v37
    %370 = vmatpush.msra.mxu0 %v36
    %371 = vmatpush.msra.mxu0 %v35
    %372 = vmatpush.msra.mxu0 %v34
    %373 = vmatmul.f32.gmra.mxu0 %v355
    %v374 = vpop.f32.mrf.mxu0
    %v375 = vadd.f32 %v350, %v374
    %376 = vdwg.mxu0
    %v377 = vadd.f32 %v375, %v43
    %v378 = vxor.u32 %v377, 2147483648
    %v379 = vmul.f32 %v378, 1.442695
    %v380 = vpow.pop %v379
    %v381 = vadd.f32 %v380, 1.0
    %v382 = vrcp.pop %v381
    %v383 = vmul.f32 %v381, %v382
    %v384 = vsub.f32 1.0, %v383
    %v385 = vmul.f32 %v382, %v384
    %v386 = vadd.f32 %v382, %v385
    %vm387 = vweird.f32 %v381
    %vm388 = vweird.f32 %v382
    %vm389 = vmor %vm387, %vm388
    %v390 = vsel %vm389, %v382, %v386
    %v391 = vand.u32 2147483647, %v381
    %vm392 = vcmp.eq.f32.partialorder %v391, 8.507059e+37
    %v393 = vand.u32 %v381, 2147483648
    %v394 = vor.u32 1.1754944e-38, %v393
    %v395 = vsel %vm392, %v394, %v390
    %v396 = vmul.f32 1.0, %v395
    %v397 = vtanh.pop %v377
    %v398 = vmul.f32 %v396, %v263
    %400 = vrot.lane.b32.xlu0 %v397, 32
    %v401 = vpop.permute.xlu0 %400
    %v403 = vmul.f32 %v396, %v401
    %405 = vrot.lane.b32.xlu0 %v403, 32
    %v406 = vpop.permute.xlu0 %405
    %v408 = vadd.f32 %v398, %v406
    %v409 = vtanh.pop %v408
    %411 = vrot.lane.b32.xlu0 %v409, 32
    %v412 = vpop.permute.xlu0 %411
    %v414 = vmul.f32 %v396, %v412
    %415 = vmatpush.msra.mxu0 0.0
    %416 = vmatpush.msra.mxu0 0.0
    %417 = vmatpush.msra.mxu0 0.0
    %418 = vmatpush.msra.mxu0 0.0
    %419 = vmatpush.msra.mxu0 0.0
    %420 = vmatpush.msra.mxu0 0.0
    %421 = vmatpush.msra.mxu0 0.0
    %422 = vmatpush.msra.mxu0 0.0
    %423 = vmatpush.msra.mxu0 0.0
    %424 = vmatpush.msra.mxu0 0.0
    %425 = vmatpush.msra.mxu0 0.0
    %426 = vmatpush.msra.mxu0 0.0
    %427 = vmatpush.msra.mxu0 %v32
    %428 = vmatpush.msra.mxu0 %v31
    %429 = vmatpush.msra.mxu0 %v30
    %430 = vmatpush.msra.mxu0 %v29
    %431 = vmatmul.f32.gmra.mxu0 %v355
    %v432 = vpop.f32.mrf.mxu0
    %v433 = vadd.f32 %v109, %v432
    %434 = vdwg.mxu0
    %v435 = vxor.u32 %v433, 2147483648
    %v436 = vmul.f32 %v435, 1.442695
    %v437 = vpow.pop %v436
    %v438 = vadd.f32 %v437, 1.0
    %v439 = vrcp.pop %v438
    %v440 = vmul.f32 %v438, %v439
    %v441 = vsub.f32 1.0, %v440
    %v442 = vmul.f32 %v439, %v441
    %v443 = vadd.f32 %v439, %v442
    %vm444 = vweird.f32 %v438
    %vm445 = vweird.f32 %v439
    %vm446 = vmor %vm444, %vm445
    %v447 = vsel %vm446, %v439, %v443
    %v448 = vand.u32 2147483647, %v438
    %vm449 = vcmp.eq.f32.partialorder %v448, 8.507059e+37
    %v450 = vand.u32 %v438, 2147483648
    %v451 = vor.u32 1.1754944e-38, %v450
    %v452 = vsel %vm449, %v451, %v447
    %v453 = vmul.f32 1.0, %v452
    %v454 = vtanh.pop %v433
    %v455 = vmul.f32 %v453, %v320
    %457 = vrot.lane.b32.xlu0 %v454, 32
    %v458 = vpop.permute.xlu0 %457
    %v460 = vmul.f32 %v453, %v458
    %462 = vrot.lane.b32.xlu0 %v460, 32
    %v463 = vpop.permute.xlu0 %462
    %v465 = vadd.f32 %v455, %v463
    %v466 = vtanh.pop %v465
    %468 = vrot.lane.b32.xlu0 %v466, 32
    %v469 = vpop.permute.xlu0 %468
    %v471 = vmul.f32 %v453, %v469
    %473 = vrot.lane.b32.xlu0 %v414, 64
    %v474 = vpop.permute.xlu0 %473
    %v475 = vsel %vm126, %v474, 0
    %477 = vmatpush.msra.mxu0 0.0
    %478 = vmatpush.msra.mxu0 0.0
    %479 = vmatpush.msra.mxu0 0.0
    %480 = vmatpush.msra.mxu0 0.0
    %481 = vmatpush.msra.mxu0 0.0
    %482 = vmatpush.msra.mxu0 0.0
    %483 = vmatpush.msra.mxu0 0.0
    %484 = vmatpush.msra.mxu0 0.0
    %485 = vmatpush.msra.mxu0 0.0
    %486 = vmatpush.msra.mxu0 0.0
    %487 = vmatpush.msra.mxu0 0.0
    %488 = vmatpush.msra.mxu0 0.0
    %489 = vmatpush.msra.mxu0 %v41
    %490 = vmatpush.msra.mxu0 %v40
    %491 = vmatpush.msra.mxu0 %v39
    %492 = vmatpush.msra.mxu0 %v38
    %493 = vmatmul.f32.gmra.mxu0 %v475
    %v494 = vpop.f32.mrf.mxu0
    %v495 = vadd.f32 0.0, %v494
    %496 = vdwg.mxu0
    %498 = vrot.lane.b32.xlu0 %v471, 64
    %v499 = vpop.permute.xlu0 %498
    %v500 = vsel %vm126, %v499, 0
    %502 = vmatpush.msra.mxu0 0.0
    %503 = vmatpush.msra.mxu0 0.0
    %504 = vmatpush.msra.mxu0 0.0
    %505 = vmatpush.msra.mxu0 0.0
    %506 = vmatpush.msra.mxu0 0.0
    %507 = vmatpush.msra.mxu0 0.0
    %508 = vmatpush.msra.mxu0 0.0
    %509 = vmatpush.msra.mxu0 0.0
    %510 = vmatpush.msra.mxu0 0.0
    %511 = vmatpush.msra.mxu0 0.0
    %512 = vmatpush.msra.mxu0 0.0
    %513 = vmatpush.msra.mxu0 0.0
    %514 = vmatpush.msra.mxu0 %v37
    %515 = vmatpush.msra.mxu0 %v36
    %516 = vmatpush.msra.mxu0 %v35
    %517 = vmatpush.msra.mxu0 %v34
    %518 = vmatmul.f32.gmra.mxu0 %v500
    %v519 = vpop.f32.mrf.mxu0
    %v520 = vadd.f32 %v495, %v519
    %521 = vdwg.mxu0
    %v522 = vadd.f32 %v520, %v43
    %v523 = vxor.u32 %v522, 2147483648
    %v524 = vmul.f32 %v523, 1.442695
    %v525 = vpow.pop %v524
    %v526 = vadd.f32 %v525, 1.0
    %v527 = vrcp.pop %v526
    %v528 = vmul.f32 %v526, %v527
    %v529 = vsub.f32 1.0, %v528
    %v530 = vmul.f32 %v527, %v529
    %v531 = vadd.f32 %v527, %v530
    %vm532 = vweird.f32 %v526
    %vm533 = vweird.f32 %v527
    %vm534 = vmor %vm532, %vm533
    %v535 = vsel %vm534, %v527, %v531
    %v536 = vand.u32 2147483647, %v526
    %vm537 = vcmp.eq.f32.partialorder %v536, 8.507059e+37
    %v538 = vand.u32 %v526, 2147483648
    %v539 = vor.u32 1.1754944e-38, %v538
    %v540 = vsel %vm537, %v539, %v535
    %v541 = vmul.f32 1.0, %v540
    %v542 = vtanh.pop %v522
    %v543 = vmul.f32 %v541, %v408
    %545 = vrot.lane.b32.xlu0 %v542, 32
    %v546 = vpop.permute.xlu0 %545
    %v548 = vmul.f32 %v541, %v546
    %550 = vrot.lane.b32.xlu0 %v548, 32
    %v551 = vpop.permute.xlu0 %550
    %v553 = vadd.f32 %v543, %v551
    %v554 = vtanh.pop %v553
    %556 = vrot.lane.b32.xlu0 %v554, 32
    %v557 = vpop.permute.xlu0 %556
    %v559 = vmul.f32 %v541, %v557
    %560 = vmatpush.msra.mxu0 0.0
    %561 = vmatpush.msra.mxu0 0.0
    %562 = vmatpush.msra.mxu0 0.0
    %563 = vmatpush.msra.mxu0 0.0
    %564 = vmatpush.msra.mxu0 0.0
    %565 = vmatpush.msra.mxu0 0.0
    %566 = vmatpush.msra.mxu0 0.0
    %567 = vmatpush.msra.mxu0 0.0
    %568 = vmatpush.msra.mxu0 0.0
    %569 = vmatpush.msra.mxu0 0.0
    %570 = vmatpush.msra.mxu0 0.0
    %571 = vmatpush.msra.mxu0 0.0
    %572 = vmatpush.msra.mxu0 %v32
    %573 = vmatpush.msra.mxu0 %v31
    %574 = vmatpush.msra.mxu0 %v30
    %575 = vmatpush.msra.mxu0 %v29
    %576 = vmatmul.f32.gmra.mxu0 %v500
    %v577 = vpop.f32.mrf.mxu0
    %v578 = vadd.f32 %v112, %v577
    %579 = vdwg.mxu0
    %v580 = vxor.u32 %v578, 2147483648
    %v581 = vmul.f32 %v580, 1.442695
    %v582 = vpow.pop %v581
    %v583 = vadd.f32 %v582, 1.0
    %v584 = vrcp.pop %v583
    %v585 = vmul.f32 %v583, %v584
    %v586 = vsub.f32 1.0, %v585
    %v587 = vmul.f32 %v584, %v586
    %v588 = vadd.f32 %v584, %v587
    %vm589 = vweird.f32 %v583
    %vm590 = vweird.f32 %v584
    %vm591 = vmor %vm589, %vm590
    %v592 = vsel %vm591, %v584, %v588
    %v593 = vand.u32 2147483647, %v583
    %vm594 = vcmp.eq.f32.partialorder %v593, 8.507059e+37
    %v595 = vand.u32 %v583, 2147483648
    %v596 = vor.u32 1.1754944e-38, %v595
    %v597 = vsel %vm594, %v596, %v592
    %v598 = vmul.f32 1.0, %v597
    %v599 = vtanh.pop %v578
    %v600 = vmul.f32 %v598, %v465
    %602 = vrot.lane.b32.xlu0 %v599, 32
    %v603 = vpop.permute.xlu0 %602
    %v605 = vmul.f32 %v598, %v603
    %607 = vrot.lane.b32.xlu0 %v605, 32
    %v608 = vpop.permute.xlu0 %607
    %v610 = vadd.f32 %v600, %v608
    %v611 = vtanh.pop %v610
    %613 = vrot.lane.b32.xlu0 %v611, 32
    %v614 = vpop.permute.xlu0 %613
    %v616 = vmul.f32 %v598, %v614
    %618 = vrot.lane.b32.xlu0 %v559, 64
    %v619 = vpop.permute.xlu0 %618
    %v620 = vsel %vm126, %v619, 0
    %622 = vmatpush.msra.mxu0 0.0
    %623 = vmatpush.msra.mxu0 0.0
    %624 = vmatpush.msra.mxu0 0.0
    %625 = vmatpush.msra.mxu0 0.0
    %626 = vmatpush.msra.mxu0 0.0
    %627 = vmatpush.msra.mxu0 0.0
    %628 = vmatpush.msra.mxu0 0.0
    %629 = vmatpush.msra.mxu0 0.0
    %630 = vmatpush.msra.mxu0 0.0
    %631 = vmatpush.msra.mxu0 0.0
    %632 = vmatpush.msra.mxu0 0.0
    %633 = vmatpush.msra.mxu0 0.0
    %634 = vmatpush.msra.mxu0 %v41
    %635 = vmatpush.msra.mxu0 %v40
    %636 = vmatpush.msra.mxu0 %v39
    %637 = vmatpush.msra.mxu0 %v38
    %638 = vmatmul.f32.gmra.mxu0 %v620
    %v639 = vpop.f32.mrf.mxu0
    %v640 = vadd.f32 0.0, %v639
    %641 = vdwg.mxu0
    %643 = vrot.lane.b32.xlu0 %v616, 64
    %v644 = vpop.permute.xlu0 %643
    %v645 = vsel %vm126, %v644, 0
    %647 = vmatpush.msra.mxu0 0.0
    %648 = vmatpush.msra.mxu0 0.0
    %649 = vmatpush.msra.mxu0 0.0
    %650 = vmatpush.msra.mxu0 0.0
    %651 = vmatpush.msra.mxu0 0.0
    %652 = vmatpush.msra.mxu0 0.0
    %653 = vmatpush.msra.mxu0 0.0
    %654 = vmatpush.msra.mxu0 0.0
    %655 = vmatpush.msra.mxu0 0.0
    %656 = vmatpush.msra.mxu0 0.0
    %657 = vmatpush.msra.mxu0 0.0
    %658 = vmatpush.msra.mxu0 0.0
    %659 = vmatpush.msra.mxu0 %v37
    %660 = vmatpush.msra.mxu0 %v36
    %661 = vmatpush.msra.mxu0 %v35
    %662 = vmatpush.msra.mxu0 %v34
    %663 = vmatmul.f32.gmra.mxu0 %v645
    %v664 = vpop.f32.mrf.mxu0
    %v665 = vadd.f32 %v640, %v664
    %666 = vdwg.mxu0
    %v667 = vadd.f32 %v665, %v43
    %v668 = vxor.u32 %v667, 2147483648
    %v669 = vmul.f32 %v668, 1.442695
    %v670 = vpow.pop %v669
    %v671 = vadd.f32 %v670, 1.0
    %v672 = vrcp.pop %v671
    %v673 = vmul.f32 %v671, %v672
    %v674 = vsub.f32 1.0, %v673
    %v675 = vmul.f32 %v672, %v674
    %v676 = vadd.f32 %v672, %v675
    %vm677 = vweird.f32 %v671
    %vm678 = vweird.f32 %v672
    %vm679 = vmor %vm677, %vm678
    %v680 = vsel %vm679, %v672, %v676
    %v681 = vand.u32 2147483647, %v671
    %vm682 = vcmp.eq.f32.partialorder %v681, 8.507059e+37
    %v683 = vand.u32 %v671, 2147483648
    %v684 = vor.u32 1.1754944e-38, %v683
    %v685 = vsel %vm682, %v684, %v680
    %v686 = vmul.f32 1.0, %v685
    %v687 = vtanh.pop %v667
    %v688 = vmul.f32 %v686, %v553
    %690 = vrot.lane.b32.xlu0 %v687, 32
    %v691 = vpop.permute.xlu0 %690
    %v693 = vmul.f32 %v686, %v691
    %695 = vrot.lane.b32.xlu0 %v693, 32
    %v696 = vpop.permute.xlu0 %695
    %v698 = vadd.f32 %v688, %v696
    %v699 = vtanh.pop %v698
    %701 = vrot.lane.b32.xlu0 %v699, 32
    %v702 = vpop.permute.xlu0 %701
    %v704 = vmul.f32 %v686, %v702
    %705 = vmatpush.msra.mxu0 0.0
    %706 = vmatpush.msra.mxu0 0.0
    %707 = vmatpush.msra.mxu0 0.0
    %708 = vmatpush.msra.mxu0 0.0
    %709 = vmatpush.msra.mxu0 0.0
    %710 = vmatpush.msra.mxu0 0.0
    %711 = vmatpush.msra.mxu0 0.0
    %712 = vmatpush.msra.mxu0 0.0
    %713 = vmatpush.msra.mxu0 0.0
    %714 = vmatpush.msra.mxu0 0.0
    %715 = vmatpush.msra.mxu0 0.0
    %716 = vmatpush.msra.mxu0 0.0
    %717 = vmatpush.msra.mxu0 %v32
    %718 = vmatpush.msra.mxu0 %v31
    %719 = vmatpush.msra.mxu0 %v30
    %720 = vmatpush.msra.mxu0 %v29
    %721 = vmatmul.f32.gmra.mxu0 %v645
    %v722 = vpop.f32.mrf.mxu0
    %v723 = vadd.f32 %v115, %v722
    %724 = vdwg.mxu0
    %v725 = vxor.u32 %v723, 2147483648
    %v726 = vmul.f32 %v725, 1.442695
    %v727 = vpow.pop %v726
    %v728 = vadd.f32 %v727, 1.0
    %v729 = vrcp.pop %v728
    %v730 = vmul.f32 %v728, %v729
    %v731 = vsub.f32 1.0, %v730
    %v732 = vmul.f32 %v729, %v731
    %v733 = vadd.f32 %v729, %v732
    %vm734 = vweird.f32 %v728
    %vm735 = vweird.f32 %v729
    %vm736 = vmor %vm734, %vm735
    %v737 = vsel %vm736, %v729, %v733
    %v738 = vand.u32 2147483647, %v728
    %vm739 = vcmp.eq.f32.partialorder %v738, 8.507059e+37
    %v740 = vand.u32 %v728, 2147483648
    %v741 = vor.u32 1.1754944e-38, %v740
    %v742 = vsel %vm739, %v741, %v737
    %v743 = vmul.f32 1.0, %v742
    %v744 = vtanh.pop %v723
    %v745 = vmul.f32 %v743, %v610
    %747 = vrot.lane.b32.xlu0 %v744, 32
    %v748 = vpop.permute.xlu0 %747
    %v750 = vmul.f32 %v743, %v748
    %752 = vrot.lane.b32.xlu0 %v750, 32
    %v753 = vpop.permute.xlu0 %752
    %v755 = vadd.f32 %v745, %v753
    %v756 = vtanh.pop %v755
    %758 = vrot.lane.b32.xlu0 %v756, 32
    %v759 = vpop.permute.xlu0 %758
    %v761 = vmul.f32 %v743, %v759
    %763 = vrot.lane.b32.xlu0 %v704, 64
    %v764 = vpop.permute.xlu0 %763
    %v765 = vsel %vm126, %v764, 0
    %767 = vmatpush.msra.mxu0 0.0
    %768 = vmatpush.msra.mxu0 0.0
    %769 = vmatpush.msra.mxu0 0.0
    %770 = vmatpush.msra.mxu0 0.0
    %771 = vmatpush.msra.mxu0 0.0
    %772 = vmatpush.msra.mxu0 0.0
    %773 = vmatpush.msra.mxu0 0.0
    %774 = vmatpush.msra.mxu0 0.0
    %775 = vmatpush.msra.mxu0 0.0
    %776 = vmatpush.msra.mxu0 0.0
    %777 = vmatpush.msra.mxu0 0.0
    %778 = vmatpush.msra.mxu0 0.0
    %779 = vmatpush.msra.mxu0 %v41
    %780 = vmatpush.msra.mxu0 %v40
    %781 = vmatpush.msra.mxu0 %v39
    %782 = vmatpush.msra.mxu0 %v38
    %783 = vmatmul.f32.gmra.mxu0 %v765
    %v784 = vpop.f32.mrf.mxu0
    %v785 = vadd.f32 0.0, %v784
    %786 = vdwg.mxu0
    %788 = vrot.lane.b32.xlu0 %v761, 64
    %v789 = vpop.permute.xlu0 %788
    %v790 = vsel %vm126, %v789, 0
    %792 = vmatpush.msra.mxu0 0.0
    %793 = vmatpush.msra.mxu0 0.0
    %794 = vmatpush.msra.mxu0 0.0
    %795 = vmatpush.msra.mxu0 0.0
    %796 = vmatpush.msra.mxu0 0.0
    %797 = vmatpush.msra.mxu0 0.0
    %798 = vmatpush.msra.mxu0 0.0
    %799 = vmatpush.msra.mxu0 0.0
    %800 = vmatpush.msra.mxu0 0.0
    %801 = vmatpush.msra.mxu0 0.0
    %802 = vmatpush.msra.mxu0 0.0
    %803 = vmatpush.msra.mxu0 0.0
    %804 = vmatpush.msra.mxu0 %v37
    %805 = vmatpush.msra.mxu0 %v36
    %806 = vmatpush.msra.mxu0 %v35
    %807 = vmatpush.msra.mxu0 %v34
    %808 = vmatmul.f32.gmra.mxu0 %v790
    %v809 = vpop.f32.mrf.mxu0
    %v810 = vadd.f32 %v785, %v809
    %811 = vdwg.mxu0
    %v812 = vadd.f32 %v810, %v43
    %v813 = vxor.u32 %v812, 2147483648
    %v814 = vmul.f32 %v813, 1.442695
    %v815 = vpow.pop %v814
    %v816 = vadd.f32 %v815, 1.0
    %v817 = vrcp.pop %v816
    %v818 = vmul.f32 %v816, %v817
    %v819 = vsub.f32 1.0, %v818
    %v820 = vmul.f32 %v817, %v819
    %v821 = vadd.f32 %v817, %v820
    %vm822 = vweird.f32 %v816
    %vm823 = vweird.f32 %v817
    %vm824 = vmor %vm822, %vm823
    %v825 = vsel %vm824, %v817, %v821
    %v826 = vand.u32 2147483647, %v816
    %vm827 = vcmp.eq.f32.partialorder %v826, 8.507059e+37
    %v828 = vand.u32 %v816, 2147483648
    %v829 = vor.u32 1.1754944e-38, %v828
    %v830 = vsel %vm827, %v829, %v825
    %v831 = vmul.f32 1.0, %v830
    %v832 = vtanh.pop %v812
    %v833 = vmul.f32 %v831, %v698
    %835 = vrot.lane.b32.xlu0 %v832, 32
    %v836 = vpop.permute.xlu0 %835
    %v838 = vmul.f32 %v831, %v836
    %840 = vrot.lane.b32.xlu0 %v838, 32
    %v841 = vpop.permute.xlu0 %840
    %v843 = vadd.f32 %v833, %v841
    %v844 = vtanh.pop %v843
    %846 = vrot.lane.b32.xlu0 %v844, 32
    %v847 = vpop.permute.xlu0 %846
    %v849 = vmul.f32 %v831, %v847
    %850 = vmatpush.msra.mxu0 0.0
    %851 = vmatpush.msra.mxu0 0.0
    %852 = vmatpush.msra.mxu0 0.0
    %853 = vmatpush.msra.mxu0 0.0
    %854 = vmatpush.msra.mxu0 0.0
    %855 = vmatpush.msra.mxu0 0.0
    %856 = vmatpush.msra.mxu0 0.0
    %857 = vmatpush.msra.mxu0 0.0
    %858 = vmatpush.msra.mxu0 0.0
    %859 = vmatpush.msra.mxu0 0.0
    %860 = vmatpush.msra.mxu0 0.0
    %861 = vmatpush.msra.mxu0 0.0
    %862 = vmatpush.msra.mxu0 %v32
    %863 = vmatpush.msra.mxu0 %v31
    %864 = vmatpush.msra.mxu0 %v30
    %865 = vmatpush.msra.mxu0 %v29
    %866 = vmatmul.f32.gmra.mxu0 %v790
    %v867 = vpop.f32.mrf.mxu0
    %v868 = vadd.f32 %v118, %v867
    %869 = vdwg.mxu0
    %v870 = vxor.u32 %v868, 2147483648
    %v871 = vmul.f32 %v870, 1.442695
    %v872 = vpow.pop %v871
    %v873 = vadd.f32 %v872, 1.0
    %v874 = vrcp.pop %v873
    %v875 = vmul.f32 %v873, %v874
    %v876 = vsub.f32 1.0, %v875
    %v877 = vmul.f32 %v874, %v876
    %v878 = vadd.f32 %v874, %v877
    %vm879 = vweird.f32 %v873
    %vm880 = vweird.f32 %v874
    %vm881 = vmor %vm879, %vm880
    %v882 = vsel %vm881, %v874, %v878
    %v883 = vand.u32 2147483647, %v873
    %vm884 = vcmp.eq.f32.partialorder %v883, 8.507059e+37
    %v885 = vand.u32 %v873, 2147483648
    %v886 = vor.u32 1.1754944e-38, %v885
    %v887 = vsel %vm884, %v886, %v882
    %v888 = vmul.f32 1.0, %v887
    %v889 = vtanh.pop %v868
    %v890 = vmul.f32 %v888, %v755
    %892 = vrot.lane.b32.xlu0 %v889, 32
    %v893 = vpop.permute.xlu0 %892
    %v895 = vmul.f32 %v888, %v893
    %897 = vrot.lane.b32.xlu0 %v895, 32
    %v898 = vpop.permute.xlu0 %897
    %v900 = vadd.f32 %v890, %v898
    %v901 = vtanh.pop %v900
    %903 = vrot.lane.b32.xlu0 %v901, 32
    %v904 = vpop.permute.xlu0 %903
    %v906 = vmul.f32 %v888, %v904
    %908 = vrot.lane.b32.xlu0 %v849, 64
    %v909 = vpop.permute.xlu0 %908
    %v910 = vsel %vm126, %v909, 0
    %912 = vmatpush.msra.mxu0 0.0
    %913 = vmatpush.msra.mxu0 0.0
    %914 = vmatpush.msra.mxu0 0.0
    %915 = vmatpush.msra.mxu0 0.0
    %916 = vmatpush.msra.mxu0 0.0
    %917 = vmatpush.msra.mxu0 0.0
    %918 = vmatpush.msra.mxu0 0.0
    %919 = vmatpush.msra.mxu0 0.0
    %920 = vmatpush.msra.mxu0 0.0
    %921 = vmatpush.msra.mxu0 0.0
    %922 = vmatpush.msra.mxu0 0.0
    %923 = vmatpush.msra.mxu0 0.0
    %924 = vmatpush.msra.mxu0 %v41
    %925 = vmatpush.msra.mxu0 %v40
    %926 = vmatpush.msra.mxu0 %v39
    %927 = vmatpush.msra.mxu0 %v38
    %928 = vmatmul.f32.gmra.mxu0 %v910
    %v929 = vpop.f32.mrf.mxu0
    %v930 = vadd.f32 0.0, %v929
    %931 = vdwg.mxu0
    %933 = vrot.lane.b32.xlu0 %v906, 64
    %v934 = vpop.permute.xlu0 %933
    %v935 = vsel %vm126, %v934, 0
    %937 = vmatpush.msra.mxu0 0.0
    %938 = vmatpush.msra.mxu0 0.0
    %939 = vmatpush.msra.mxu0 0.0
    %940 = vmatpush.msra.mxu0 0.0
    %941 = vmatpush.msra.mxu0 0.0
    %942 = vmatpush.msra.mxu0 0.0
    %943 = vmatpush.msra.mxu0 0.0
    %944 = vmatpush.msra.mxu0 0.0
    %945 = vmatpush.msra.mxu0 0.0
    %946 = vmatpush.msra.mxu0 0.0
    %947 = vmatpush.msra.mxu0 0.0
    %948 = vmatpush.msra.mxu0 0.0
    %949 = vmatpush.msra.mxu0 %v37
    %950 = vmatpush.msra.mxu0 %v36
    %951 = vmatpush.msra.mxu0 %v35
    %952 = vmatpush.msra.mxu0 %v34
    %953 = vmatmul.f32.gmra.mxu0 %v935
    %v954 = vpop.f32.mrf.mxu0
    %v955 = vadd.f32 %v930, %v954
    %956 = vdwg.mxu0
    %v957 = vadd.f32 %v955, %v43
    %v958 = vxor.u32 %v957, 2147483648
    %v959 = vmul.f32 %v958, 1.442695
    %v960 = vpow.pop %v959
    %v961 = vadd.f32 %v960, 1.0
    %v962 = vrcp.pop %v961
    %v963 = vmul.f32 %v961, %v962
    %v964 = vsub.f32 1.0, %v963
    %v965 = vmul.f32 %v962, %v964
    %v966 = vadd.f32 %v962, %v965
    %vm967 = vweird.f32 %v961
    %vm968 = vweird.f32 %v962
    %vm969 = vmor %vm967, %vm968
    %v970 = vsel %vm969, %v962, %v966
    %v971 = vand.u32 2147483647, %v961
    %vm972 = vcmp.eq.f32.partialorder %v971, 8.507059e+37
    %v973 = vand.u32 %v961, 2147483648
    %v974 = vor.u32 1.1754944e-38, %v973
    %v975 = vsel %vm972, %v974, %v970
    %v976 = vmul.f32 1.0, %v975
    %v977 = vtanh.pop %v957
    %v978 = vmul.f32 %v976, %v843
    %980 = vrot.lane.b32.xlu0 %v977, 32
    %v981 = vpop.permute.xlu0 %980
    %v983 = vmul.f32 %v976, %v981
    %985 = vrot.lane.b32.xlu0 %v983, 32
    %v986 = vpop.permute.xlu0 %985
    %v988 = vadd.f32 %v978, %v986
    %v989 = vtanh.pop %v988
    %991 = vrot.lane.b32.xlu0 %v989, 32
    %v992 = vpop.permute.xlu0 %991
    %v994 = vmul.f32 %v976, %v992
    %995 = vmatpush.msra.mxu0 0.0
    %996 = vmatpush.msra.mxu0 0.0
    %997 = vmatpush.msra.mxu0 0.0
    %998 = vmatpush.msra.mxu0 0.0
    %999 = vmatpush.msra.mxu0 0.0
    %1000 = vmatpush.msra.mxu0 0.0
    %1001 = vmatpush.msra.mxu0 0.0
    %1002 = vmatpush.msra.mxu0 0.0
    %1003 = vmatpush.msra.mxu0 0.0
    %1004 = vmatpush.msra.mxu0 0.0
    %1005 = vmatpush.msra.mxu0 0.0
    %1006 = vmatpush.msra.mxu0 0.0
    %1007 = vmatpush.msra.mxu0 %v32
    %1008 = vmatpush.msra.mxu0 %v31
    %1009 = vmatpush.msra.mxu0 %v30
    %1010 = vmatpush.msra.mxu0 %v29
    %1011 = vmatmul.f32.gmra.mxu0 %v935
    %v1012 = vpop.f32.mrf.mxu0
    %v1013 = vadd.f32 %v121, %v1012
    %1014 = vdwg.mxu0
    %v1015 = vxor.u32 %v1013, 2147483648
    %v1016 = vmul.f32 %v1015, 1.442695
    %v1017 = vpow.pop %v1016
    %v1018 = vadd.f32 %v1017, 1.0
    %v1019 = vrcp.pop %v1018
    %v1020 = vmul.f32 %v1018, %v1019
    %v1021 = vsub.f32 1.0, %v1020
    %v1022 = vmul.f32 %v1019, %v1021
    %v1023 = vadd.f32 %v1019, %v1022
    %vm1024 = vweird.f32 %v1018
    %vm1025 = vweird.f32 %v1019
    %vm1026 = vmor %vm1024, %vm1025
    %v1027 = vsel %vm1026, %v1019, %v1023
    %v1028 = vand.u32 2147483647, %v1018
    %vm1029 = vcmp.eq.f32.partialorder %v1028, 8.507059e+37
    %v1030 = vand.u32 %v1018, 2147483648
    %v1031 = vor.u32 1.1754944e-38, %v1030
    %v1032 = vsel %vm1029, %v1031, %v1027
    %v1033 = vmul.f32 1.0, %v1032
    %v1034 = vtanh.pop %v1013
    %v1035 = vmul.f32 %v1033, %v900
    %1037 = vrot.lane.b32.xlu0 %v1034, 32
    %v1038 = vpop.permute.xlu0 %1037
    %v1040 = vmul.f32 %v1033, %v1038
    %1042 = vrot.lane.b32.xlu0 %v1040, 32
    %v1043 = vpop.permute.xlu0 %1042
    %v1045 = vadd.f32 %v1035, %v1043
    %v1046 = vtanh.pop %v1045
    %1048 = vrot.lane.b32.xlu0 %v1046, 32
    %v1049 = vpop.permute.xlu0 %1048
    %v1051 = vmul.f32 %v1033, %v1049
    %1053 = vrot.lane.b32.xlu0 %v994, 64
    %v1054 = vpop.permute.xlu0 %1053
    %v1055 = vsel %vm126, %v1054, 0
    %1057 = vmatpush.msra.mxu0 0.0
    %1058 = vmatpush.msra.mxu0 0.0
    %1059 = vmatpush.msra.mxu0 0.0
    %1060 = vmatpush.msra.mxu0 0.0
    %1061 = vmatpush.msra.mxu0 0.0
    %1062 = vmatpush.msra.mxu0 0.0
    %1063 = vmatpush.msra.mxu0 0.0
    %1064 = vmatpush.msra.mxu0 0.0
    %1065 = vmatpush.msra.mxu0 0.0
    %1066 = vmatpush.msra.mxu0 0.0
    %1067 = vmatpush.msra.mxu0 0.0
    %1068 = vmatpush.msra.mxu0 0.0
    %1069 = vmatpush.msra.mxu0 %v41
    %1070 = vmatpush.msra.mxu0 %v40
    %1071 = vmatpush.msra.mxu0 %v39
    %1072 = vmatpush.msra.mxu0 %v38
    %1073 = vmatmul.f32.gmra.mxu0 %v1055
    %v1074 = vpop.f32.mrf.mxu0
    %v1075 = vadd.f32 0.0, %v1074
    %1076 = vdwg.mxu0
    %1078 = vrot.lane.b32.xlu0 %v1051, 64
    %v1079 = vpop.permute.xlu0 %1078
    %v1080 = vsel %vm126, %v1079, 0
    %1082 = vmatpush.msra.mxu0 0.0
    %1083 = vmatpush.msra.mxu0 0.0
    %1084 = vmatpush.msra.mxu0 0.0
    %1085 = vmatpush.msra.mxu0 0.0
    %1086 = vmatpush.msra.mxu0 0.0
    %1087 = vmatpush.msra.mxu0 0.0
    %1088 = vmatpush.msra.mxu0 0.0
    %1089 = vmatpush.msra.mxu0 0.0
    %1090 = vmatpush.msra.mxu0 0.0
    %1091 = vmatpush.msra.mxu0 0.0
    %1092 = vmatpush.msra.mxu0 0.0
    %1093 = vmatpush.msra.mxu0 0.0
    %1094 = vmatpush.msra.mxu0 %v37
    %1095 = vmatpush.msra.mxu0 %v36
    %1096 = vmatpush.msra.mxu0 %v35
    %1097 = vmatpush.msra.mxu0 %v34
    %1098 = vmatmul.f32.gmra.mxu0 %v1080
    %v1099 = vpop.f32.mrf.mxu0
    %v1100 = vadd.f32 %v1075, %v1099
    %1101 = vdwg.mxu0
    %v1102 = vadd.f32 %v1100, %v43
    %v1103 = vxor.u32 %v1102, 2147483648
    %v1104 = vmul.f32 %v1103, 1.442695
    %v1105 = vpow.pop %v1104
    %v1106 = vadd.f32 %v1105, 1.0
    %v1107 = vrcp.pop %v1106
    %v1108 = vmul.f32 %v1106, %v1107
    %v1109 = vsub.f32 1.0, %v1108
    %v1110 = vmul.f32 %v1107, %v1109
    %v1111 = vadd.f32 %v1107, %v1110
    %vm1112 = vweird.f32 %v1106
    %vm1113 = vweird.f32 %v1107
    %vm1114 = vmor %vm1112, %vm1113
    %v1115 = vsel %vm1114, %v1107, %v1111
    %v1116 = vand.u32 2147483647, %v1106
    %vm1117 = vcmp.eq.f32.partialorder %v1116, 8.507059e+37
    %v1118 = vand.u32 %v1106, 2147483648
    %v1119 = vor.u32 1.1754944e-38, %v1118
    %v1120 = vsel %vm1117, %v1119, %v1115
    %v1121 = vmul.f32 1.0, %v1120
    %v1122 = vtanh.pop %v1102
    %v1123 = vmul.f32 %v1121, %v988
    %1125 = vrot.lane.b32.xlu0 %v1122, 32
    %v1126 = vpop.permute.xlu0 %1125
    %v1128 = vmul.f32 %v1121, %v1126
    %1130 = vrot.lane.b32.xlu0 %v1128, 32
    %v1131 = vpop.permute.xlu0 %1130
    %v1133 = vadd.f32 %v1123, %v1131
    %v1134 = vtanh.pop %v1133
    %1136 = vrot.lane.b32.xlu0 %v1134, 32
    %v1137 = vpop.permute.xlu0 %1136
    %v1139 = vmul.f32 %v1121, %v1137
    %1140 = vmatpush.msra.mxu0 0.0
    %1141 = vmatpush.msra.mxu0 0.0
    %1142 = vmatpush.msra.mxu0 0.0
    %1143 = vmatpush.msra.mxu0 0.0
    %1144 = vmatpush.msra.mxu0 0.0
    %1145 = vmatpush.msra.mxu0 0.0
    %1146 = vmatpush.msra.mxu0 0.0
    %1147 = vmatpush.msra.mxu0 0.0
    %1148 = vmatpush.msra.mxu0 0.0
    %1149 = vmatpush.msra.mxu0 0.0
    %1150 = vmatpush.msra.mxu0 0.0
    %1151 = vmatpush.msra.mxu0 0.0
    %1152 = vmatpush.msra.mxu0 %v32
    %1153 = vmatpush.msra.mxu0 %v31
    %1154 = vmatpush.msra.mxu0 %v30
    %1155 = vmatpush.msra.mxu0 %v29
    %1156 = vmatmul.f32.gmra.mxu0 %v1080
    %v1157 = vpop.f32.mrf.mxu0
    %v1158 = vadd.f32 %v124, %v1157
    %1159 = vdwg.mxu0
    %v1160 = vxor.u32 %v1158, 2147483648
    %v1161 = vmul.f32 %v1160, 1.442695
    %v1162 = vpow.pop %v1161
    %v1163 = vadd.f32 %v1162, 1.0
    %v1164 = vrcp.pop %v1163
    %v1165 = vmul.f32 %v1163, %v1164
    %v1166 = vsub.f32 1.0, %v1165
    %v1167 = vmul.f32 %v1164, %v1166
    %v1168 = vadd.f32 %v1164, %v1167
    %vm1169 = vweird.f32 %v1163
    %vm1170 = vweird.f32 %v1164
    %vm1171 = vmor %vm1169, %vm1170
    %v1172 = vsel %vm1171, %v1164, %v1168
    %v1173 = vand.u32 2147483647, %v1163
    %vm1174 = vcmp.eq.f32.partialorder %v1173, 8.507059e+37
    %v1175 = vand.u32 %v1163, 2147483648
    %v1176 = vor.u32 1.1754944e-38, %v1175
    %v1177 = vsel %vm1174, %v1176, %v1172
    %v1178 = vmul.f32 1.0, %v1177
    %v1179 = vtanh.pop %v1158
    %v1180 = vmul.f32 %v1178, %v1045
    %1182 = vrot.lane.b32.xlu0 %v1179, 32
    %v1183 = vpop.permute.xlu0 %1182
    %v1185 = vmul.f32 %v1178, %v1183
    %1187 = vrot.lane.b32.xlu0 %v1185, 32
    %v1188 = vpop.permute.xlu0 %1187
    %v1190 = vadd.f32 %v1180, %v1188
    %v1191 = vtanh.pop %v1190
    %1193 = vrot.lane.b32.xlu0 %v1191, 32
    %v1194 = vpop.permute.xlu0 %1193
    %v1196 = vmul.f32 %v1178, %v1194
    %1198 = vrot.lane.b32.xlu0 %v1139, 64
    %v1199 = vpop.permute.xlu0 %1198
    %v1200 = vsel %vm126, %v1199, 0
    %1202 = vmatpush.msra.mxu0 0.0
    %1203 = vmatpush.msra.mxu0 0.0
    %1204 = vmatpush.msra.mxu0 0.0
    %1205 = vmatpush.msra.mxu0 0.0
    %1206 = vmatpush.msra.mxu0 0.0
    %1207 = vmatpush.msra.mxu0 0.0
    %1208 = vmatpush.msra.mxu0 0.0
    %1209 = vmatpush.msra.mxu0 0.0
    %1210 = vmatpush.msra.mxu0 0.0
    %1211 = vmatpush.msra.mxu0 0.0
    %1212 = vmatpush.msra.mxu0 0.0
    %1213 = vmatpush.msra.mxu0 0.0
    %1214 = vmatpush.msra.mxu0 %v41
    %1215 = vmatpush.msra.mxu0 %v40
    %1216 = vmatpush.msra.mxu0 %v39
    %1217 = vmatpush.msra.mxu0 %v38
    %1218 = vmatmul.f32.gmra.mxu0 %v1200
    %v1219 = vpop.f32.mrf.mxu0
    %v1220 = vadd.f32 0.0, %v1219
    %1221 = vdwg.mxu0
    %1223 = vrot.lane.b32.xlu0 %v1196, 64
    %v1224 = vpop.permute.xlu0 %1223
    %v1225 = vsel %vm126, %v1224, 0
    %1227 = vmatpush.msra.mxu0 0.0
    %1228 = vmatpush.msra.mxu0 0.0
    %1229 = vmatpush.msra.mxu0 0.0
    %1230 = vmatpush.msra.mxu0 0.0
    %1231 = vmatpush.msra.mxu0 0.0
    %1232 = vmatpush.msra.mxu0 0.0
    %1233 = vmatpush.msra.mxu0 0.0
    %1234 = vmatpush.msra.mxu0 0.0
    %1235 = vmatpush.msra.mxu0 0.0
    %1236 = vmatpush.msra.mxu0 0.0
    %1237 = vmatpush.msra.mxu0 0.0
    %1238 = vmatpush.msra.mxu0 0.0
    %1239 = vmatpush.msra.mxu0 %v37
    %1240 = vmatpush.msra.mxu0 %v36
    %1241 = vmatpush.msra.mxu0 %v35
    %1242 = vmatpush.msra.mxu0 %v34
    %1243 = vmatmul.f32.gmra.mxu0 %v1225
    %v1244 = vpop.f32.mrf.mxu0
    %v1245 = vadd.f32 %v1220, %v1244
    %1246 = vdwg.mxu0
    %v1247 = vadd.f32 %v1245, %v43
    %v1248 = vxor.u32 %v1247, 2147483648
    %v1249 = vmul.f32 %v1248, 1.442695
    %v1250 = vpow.pop %v1249
    %v1251 = vadd.f32 %v1250, 1.0
    %v1252 = vrcp.pop %v1251
    %v1253 = vmul.f32 %v1251, %v1252
    %v1254 = vsub.f32 1.0, %v1253
    %v1255 = vmul.f32 %v1252, %v1254
    %v1256 = vadd.f32 %v1252, %v1255
    %vm1257 = vweird.f32 %v1251
    %vm1258 = vweird.f32 %v1252
    %vm1259 = vmor %vm1257, %vm1258
    %v1260 = vsel %vm1259, %v1252, %v1256
    %v1261 = vand.u32 2147483647, %v1251
    %vm1262 = vcmp.eq.f32.partialorder %v1261, 8.507059e+37
    %v1263 = vand.u32 %v1251, 2147483648
    %v1264 = vor.u32 1.1754944e-38, %v1263
    %v1265 = vsel %vm1262, %v1264, %v1260
    %v1266 = vmul.f32 1.0, %v1265
    %v1267 = vtanh.pop %v1247
    %v1268 = vmul.f32 %v1266, %v1133
    %1270 = vrot.lane.b32.xlu0 %v1267, 32
    %v1271 = vpop.permute.xlu0 %1270
    %v1273 = vmul.f32 %v1266, %v1271
    %1275 = vrot.lane.b32.xlu0 %v1273, 32
    %v1276 = vpop.permute.xlu0 %1275
    %v1278 = vadd.f32 %v1268, %v1276
    %v1279 = vtanh.pop %v1278
    %1281 = vrot.lane.b32.xlu0 %v1279, 32
    %v1282 = vpop.permute.xlu0 %1281
    %v1284 = vmul.f32 %v1266, %v1282
    %v1285 = vperm.slane %v48, 0
    %1287 = vrot.lane.b32.xlu0 %v1284, 64
    %v1288 = vpop.permute.xlu0 %1287
    %v1289 = vsel %vm126, %v1288, 0
    %1291 = vmatpush.msra.mxu0 0.0
    %1292 = vmatpush.msra.mxu0 0.0
    %1293 = vmatpush.msra.mxu0 0.0
    %1294 = vmatpush.msra.mxu0 0.0
    %1295 = vmatpush.msra.mxu0 0.0
    %1296 = vmatpush.msra.mxu0 0.0
    %1297 = vmatpush.msra.mxu0 0.0
    %1298 = vmatpush.msra.mxu0 0.0
    %1299 = vmatpush.msra.mxu0 0.0
    %1300 = vmatpush.msra.mxu0 0.0
    %1301 = vmatpush.msra.mxu0 0.0
    %1302 = vmatpush.msra.mxu0 0.0
    %1303 = vmatpush.msra.mxu0 %v47
    %1304 = vmatpush.msra.mxu0 %v46
    %1305 = vmatpush.msra.mxu0 %v45
    %1306 = vmatpush.msra.mxu0 %v44
    %1307 = vmatmul.f32.gmra.mxu0 %v1289
    %v1308 = vpop.f32.mrf.mxu0
    %v1309 = vadd.f32 %v1285, %v1308
    %1310 = vdwg.mxu0
    %v1311 = vmax.f32 %v1309, 0.0
    %v1312 = vperm.slane %v49, 0
    %v1313 = vmul.f32 %v1311, %v1312
    %1314 = vadd.xlane.f32.xlu0 %v1313
    %v1315 = vpop.xlane.xlu0 %1314
    %v1316 = vperm.slane %v50, 0
    %v1317 = vadd.f32 %v1315, %v1316
    %vm1318 = vcmask 7168
    %1319 = vst.msk [vmem:[%s2] sm:$0xff] %vm1318, %v1317
    // Predicated region
    $region14: #{fwd.1} parent=1 // pred_check
      _
    $region15: #{fwd.1} parent=1 // pred_check_branch
      %1321 = sbr.rel (0) target = $region17
    $region16: #{fwd.1} parent=1 // pred_region
      _
    $region17: #{fwd.1} parent=1 // pred_fallthru
      _
    // Predicated region
    $region18: #{fwd.1} parent=1 // pred_check
      _
    $region19: #{fwd.1} parent=1 // pred_check_branch
      %1323 = sbr.rel (0) target = $region21
    $region20: #{fwd.1} parent=1 // pred_region
      _
    $region21: #{fwd.1} parent=1 // pred_fallthru
      _
    %1324 = vsyncpa [#allocation3], 1

</llo_original>
